<compile_context>
chip_gen: v5e
topology: v5e:2x2
jax: 0.10.0
libtpu: 0.0.40
codegen_flags: <defaults>
</compile_context>

<pallas_src>
import jax
import jax.numpy as jnp
from jax import lax
from jax.experimental import pallas as pl
from jax.experimental.pallas import tpu as pltpu

# ----- model sizes (small, consistent with the module) -----
B, L, D, T = 2, 5, 16, 3          # batch, seq len (must be 5), latent dim, targets
NV, NH, NU, NU1 = 4, 8, 4, 8      # n_v (must be 4), n_h, n_u, n_u1
NUM_USERS, NUM_ITEMS = 10, 50
FC1_H = NH * 5                    # fc1_dim_h = 40
D2 = FC1_H + D + NU1              # W2 embedding dim = 64
ROUTINGS = 3

SLAB_LANES = 128


def _roundup(x, m):
    return -(-x // m) * m


def _build_slab_layout():
    """Pack order for the parameter slab: name -> (row_start, nrows, ncols).

    Every parameter starts on an 8-aligned sublane row; last dim sits on lanes.
    """
    entries = [
        ('wv',   (NV, L)),        # conv_v2 weight
        ('bv',   (1, NV)),        # conv_v2 bias
        ('wh',   (NH, D)),        # conv_h2 weight
        ('bh',   (1, NH)),        # conv_h2 bias
        ('wu',   (1, NU)),        # conv_u  weight (1x1)
        ('bu',   (1, NU)),        # conv_u  bias
        ('wu1t', (D, NU1)),       # conv_u1 weight, transposed
        ('bu1',  (1, NU1)),       # conv_u1 bias
        ('cw1',  (NH, D)),        # CW1
        ('cw2',  (D, NV)),        # CW2
        ('cw00', (NV * D, FC1_H)),  # CW00 (row block c = capsule c of the v path)
        ('cw11', (NU * D, NU1)),    # CW11 (row block c = channel c of the u path)
    ]
    layout, row = {}, 0
    for name, (r, c) in entries:
        layout[name] = (row, r, c)
        row += _roundup(r, 8)
    return layout, _roundup(row, 8)


SLAB_LAYOUT, SLAB_ROWS = _build_slab_layout()


# ---------------- in-kernel helpers (EUP-friendly) ----------------
def _sigmoid(x):
    return pl.reciprocal(1.0 + jnp.exp(-x), approx=True)


def _softmax_ax1(x):
    e = jnp.exp(x)
    return e * pl.reciprocal(jnp.sum(e, axis=1, keepdims=True), approx=True)


def _squash(x):
    sn = jnp.sum(x * x, axis=-1, keepdims=True)
    scale = sn * pl.reciprocal(1.0 + sn, approx=True)        # sn / (1 + sn)
    # eps guards the sn == 0 NaN of the reference squash_v1; negligible otherwise.
    return scale * lax.rsqrt(sn + 1e-12) * x


# ---------------- the kernel ----------------
def ccn4sr_kernel(embs_ref, uemb_ref, w2_ref, b2_ref, slab_ref, res_ref, x_ref):
    def _p(name):
        r0, nr, nc = SLAB_LAYOUT[name]
        return slab_ref[pl.ds(r0, nr), pl.ds(0, nc)]

    embs = embs_ref[...]                     # (B, L, D) sequence item embeddings
    uemb = uemb_ref[...]                     # (B, D)    user embedding
    bsz = embs.shape[0]

    # ---- conv_v2: Conv2d(1, nv, (L, 1)) + sigmoid -> (B, nv, d) ----
    wv, bv = _p('wv'), _p('bv')                                  # (NV,L), (1,NV)
    wvb = jnp.broadcast_to(wv[None], (bsz, NV, L))
    pre_v = jnp.einsum('bvl,bld->bvd', wvb, embs,
                       preferred_element_type=jnp.float32)
    out_v = _sigmoid(pre_v + bv[:, :, None])                     # (B, NV, D)

    # ---- conv_h2: Conv2d(1, nh, (1, d)) + sigmoid -> (B, nh, L) ----
    wh, bh = _p('wh'), _p('bh')                                  # (NH,D), (1,NH)
    whb = jnp.broadcast_to(wh[None], (bsz, NH, D))
    pre_h = jnp.einsum('bhd,bld->bhl', whb, embs,
                       preferred_element_type=jnp.float32)
    out_h = _sigmoid(pre_h + bh[:, :, None])                     # (B, NH, L)

    # ---- conv_u: 1x1 conv + sigmoid -> (B, nu, d) ----
    wu, bu = _p('wu'), _p('bu')                                  # (1,NU), (1,NU)
    out_u = _sigmoid(uemb[:, None, :] * wu[:, :, None] + bu[:, :, None])

    # ---- conv_u1: Conv2d(1, nu1, (1, d)) + sigmoid -> (B, nu1) ----
    wu1t, bu1 = _p('wu1t'), _p('bu1')                            # (D,NU1), (1,NU1)
    out_u1 = _sigmoid(jnp.dot(uemb, wu1t,
                              preferred_element_type=jnp.float32) + bu1)

    # ---- item_routing (v path); inputs_hat[b,c,i,j] = CW2[i,j] * s_v[b,i] ----
    cw2 = _p('cw2')                                              # (D, NV)
    cw2b = jnp.broadcast_to(cw2[None], (bsz, D, NV))             # hoisted
    s_v = jnp.sum(out_v, axis=1)                                 # (B, D)
    bb = jnp.zeros((bsz, 4, NV), jnp.float32)                    # num_capsule = 4
    out_v_caps = None
    for r in range(ROUTINGS):
        cc = _softmax_ax1(bb)                                    # (B, 4, NV)
        t = jnp.einsum('bcj,bij->bci', cc, cw2b,
                       preferred_element_type=jnp.float32)       # (B, 4, D)
        out_v_caps = _squash(s_v[:, None, :] * t)                # (B, 4, D)
        if r < ROUTINGS - 1:
            tmp = s_v[:, None, :] * out_v_caps
            bb = bb + jnp.einsum('bci,bij->bcj', tmp, cw2b,
                                 preferred_element_type=jnp.float32)

    # ---- item_routing1 (h path); inputs_hat[b,c,i,j] = CW1[i,j] * s_h[b,i] ----
    cw1 = _p('cw1')                                              # (NH, D)
    cw1b = jnp.broadcast_to(cw1[None], (bsz, NH, D))             # hoisted
    s_h = jnp.sum(out_h, axis=2)                                 # (B, NH)
    bb = jnp.zeros((bsz, 5, D), jnp.float32)                     # num_capsule = 5
    out_h_caps = None
    for r in range(ROUTINGS):
        cc = _softmax_ax1(bb)                                    # (B, 5, D)
        t = jnp.einsum('bcj,bij->bci', cc, cw1b,
                       preferred_element_type=jnp.float32)       # (B, 5, NH)
        out_h_caps = _squash(s_h[:, None, :] * t)                # (B, 5, NH)
        if r < ROUTINGS - 1:
            tmp = s_h[:, None, :] * out_h_caps
            bb = bb + jnp.einsum('bci,bij->bcj', tmp, cw1b,
                                 preferred_element_type=jnp.float32)

    # ---- merge_out_vu (flat, 40) = relu(out_v_flat @ CW00 + out_h_flat) ----
    cw00_r0 = SLAB_LAYOUT['cw00'][0]
    vu = jnp.zeros((bsz, FC1_H), jnp.float32)
    for c in range(NV):                         # row block c of CW00 (distinct data)
        blk = slab_ref[pl.ds(cw00_r0 + c * D, D), pl.ds(0, FC1_H)]   # (D, 40)
        vu = vu + jnp.dot(out_v_caps[:, c, :], blk,
                          preferred_element_type=jnp.float32)

    # assemble x = [merge(40) | user_emb(16) | user_merge0(8)] in VMEM scratch
    for s in range(5):                          # flatten out_h_caps row-major
        x_ref[:, pl.ds(s * NH, NH)] = out_h_caps[:, s, :]
    x_ref[:, pl.ds(0, FC1_H)] = jnp.maximum(
        vu + x_ref[:, pl.ds(0, FC1_H)], 0.0)    # ac_fc = relu

    # ---- user_merge0 = sigmoid(out_u_flat @ CW11 + out_u1) ----
    cw11_r0 = SLAB_LAYOUT['cw11'][0]
    um = out_u1
    for c in range(NU):
        blk = slab_ref[pl.ds(cw11_r0 + c * D, D), pl.ds(0, NU1)]     # (D, NU1)
        um = um + jnp.dot(out_u[:, c, :], blk,
                          preferred_element_type=jnp.float32)
    x_ref[:, pl.ds(FC1_H, D)] = uemb
    x_ref[:, pl.ds(FC1_H + D, NU1)] = _sigmoid(um)

    # ---- res[b,t] = b2[b,t] + <W2[b,t,:], x[b,:]>  (single lane reduction) ----
    x = x_ref[...]                                               # (B, D2)
    res_ref[...] = b2_ref[...] + jnp.sum(w2_ref[...] * x[:, None, :], axis=-1)


# ---------------- host-side glue ----------------
def init_params(key):
    ks = jax.random.split(key, 12)
    p = {
        'user_emb': jax.random.normal(ks[0], (NUM_USERS, D)) * (1.0 / D),
        'item_emb': jax.random.normal(ks[1], (NUM_ITEMS, D)) * (1.0 / D),
        'conv_v_w': jax.random.normal(ks[2], (NV, L)) * 0.1,    # Conv2d(1,nv,(L,1))
        'conv_v_b': jnp.full((1, NV), 0.01),
        'conv_h_w': jax.random.normal(ks[3], (NH, D)) * 0.1,    # Conv2d(1,nh,(1,d))
        'conv_h_b': jnp.full((1, NH), 0.01),
        'conv_u_w': jax.random.normal(ks[4], (1, NU)) * 0.1,    # Conv2d(1,nu,(1,1))
        'conv_u_b': jnp.full((1, NU), 0.01),
        'conv_u1_w': jax.random.normal(ks[5], (NU1, D)) * 0.1,  # Conv2d(1,nu1,(1,d))
        'conv_u1_b': jnp.full((1, NU1), 0.01),
        'CW1': jax.random.normal(ks[6], (NH, D)),
        'CW2': jax.random.normal(ks[7], (D, NV)),
        'CW00': jax.random.normal(ks[8], (NV * D, FC1_H)),
        'CW11': jax.random.normal(ks[9], (NU * D, NU1)),
        'W2': jax.random.normal(ks[10], (NUM_ITEMS, D2)) * (1.0 / D2),
        'b2': jnp.zeros((NUM_ITEMS, 1)),
    }
    return jax.tree_util.tree_map(lambda a: a.astype(jnp.float32), p)


def pack_param_slab(params):
    """Pack all small parameters into one lane-dense (SLAB_ROWS, 128) slab."""
    entries = {
        'wv': params['conv_v_w'], 'bv': params['conv_v_b'],
        'wh': params['conv_h_w'], 'bh': params['conv_h_b'],
        'wu': params['conv_u_w'], 'bu': params['conv_u_b'],
        'wu1t': params['conv_u1_w'].T, 'bu1': params['conv_u1_b'],
        'cw1': params['CW1'], 'cw2': params['CW2'],
        'cw00': params['CW00'], 'cw11': params['CW11'],
    }
    slab = jnp.zeros((SLAB_ROWS, SLAB_LANES), jnp.float32)
    for name, arr in entries.items():
        r0, nr, nc = SLAB_LAYOUT[name]
        slab = slab.at[r0:r0 + nr, :nc].set(arr.astype(jnp.float32))
    return slab


def ccn4sr_forward(params, param_slab, seq_var, user_var, item_var):
    # plain-JAX glue: embedding gathers only (W2 stays one un-split tensor).
    embs = params['item_emb'][seq_var]             # (B, L, d)
    uemb = params['user_emb'][user_var[:, 0]]      # (B, d)   (user_var: (B,1))
    w2 = params['W2'][item_var]                    # (B, T, D2)
    b2 = params['b2'][item_var][..., 0]            # (B, T)

    vmem = lambda: pl.BlockSpec(memory_space=pltpu.MemorySpace.VMEM)
    return pl.pallas_call(
        ccn4sr_kernel,
        out_shape=jax.ShapeDtypeStruct((B, T), jnp.float32),
        in_specs=[vmem() for _ in range(5)],
        out_specs=vmem(),
        scratch_shapes=[pltpu.VMEM((B, D2), jnp.float32)],   # x feature vector
    )(embs, uemb, w2, b2, param_slab)
    # TODO(synk): nn.Dropout is identity (inference mode), the torch
    # print(out_v.shape) side-effect is omitted, and the for_pred=True
    # all-items path (which would want a grid + scalar-prefetched item ids)
    # is not implemented; ac_fc is assumed to be relu.


if __name__ == "__main__":
    key = jax.random.PRNGKey(0)
    kp, k1, k2, k3 = jax.random.split(key, 4)
    params = init_params(kp)
    param_slab = pack_param_slab(params)            # packed once, reused per call

    seq_var = jax.random.randint(k1, (B, L), 0, NUM_ITEMS)    # sequence item ids
    user_var = jax.random.randint(k2, (B, 1), 0, NUM_USERS)   # user ids
    item_var = jax.random.randint(k3, (B, T), 0, NUM_ITEMS)   # target item ids

    fwd = jax.jit(ccn4sr_forward)
    res = jax.block_until_ready(fwd(params, param_slab, seq_var, user_var, item_var))
    assert res.shape == (B, T), res.shape
    assert bool(jnp.all(jnp.isfinite(res)))
    print("KERNEL_OK")
</pallas_src>

<mosaic_0001>
module attributes {stable_mosaic.version = 11 : i64} {
  func.func @ccn4sr_kernel(%arg0: memref<2x5x16xf32, #tpu.memory_space<vmem>>, %arg1: memref<2x16xf32, #tpu.memory_space<vmem>>, %arg2: memref<2x3x64xf32, #tpu.memory_space<vmem>>, %arg3: memref<2x3xf32, #tpu.memory_space<vmem>>, %arg4: memref<224x128xf32, #tpu.memory_space<vmem>>, %arg5: memref<2x3xf32, #tpu.memory_space<vmem>>, %arg6: memref<2x64xf32, #tpu.memory_space<vmem>>) attributes {dimension_semantics = [], scalar_prefetch = 0 : i64, scratch_operands = 1 : i64, tpu.core_type = #tpu.core_type<tc>} {
    %c0 = arith.constant 0 : index
    %c0_0 = arith.constant 0 : index
    %c0_1 = arith.constant 0 : index
    %0 = vector.load %arg0[%c0, %c0_0, %c0_1] : memref<2x5x16xf32, #tpu.memory_space<vmem>>, vector<2x5x16xf32>
    %c0_2 = arith.constant 0 : index
    %c0_3 = arith.constant 0 : index
    %1 = vector.load %arg1[%c0_2, %c0_3] : memref<2x16xf32, #tpu.memory_space<vmem>>, vector<2x16xf32>
    %c0_4 = arith.constant 0 : index
    %c0_5 = arith.constant 0 : index
    %2 = vector.load %arg4[%c0_4, %c0_5] : memref<224x128xf32, #tpu.memory_space<vmem>>, vector<4x5xf32>
    %c8 = arith.constant 8 : index
    %c0_6 = arith.constant 0 : index
    %3 = vector.load %arg4[%c8, %c0_6] : memref<224x128xf32, #tpu.memory_space<vmem>>, vector<1x4xf32>
    %4 = vector.shape_cast %2 : vector<4x5xf32> to vector<1x4x5xf32>
    %5 = vector.shape_cast %4 : vector<1x4x5xf32> to vector<1x4x5xf32>
    %6 = vector.broadcast %5 : vector<1x4x5xf32> to vector<2x4x5xf32>
    "tpu.trace_start"() <{level = 10 : i32, message = "bvl,bld->bvd"}> : () -> ()
    %cst = arith.constant dense<0.000000e+00> : vector<2x4x16xf32>
    %7 = tpu.matmul %6, %0, %cst {dimension_numbers = #tpu.dot_dimension_numbers<[2], [1], [1], [2], [0, 0, 0, 1, 1, 2], [0], [0]>} : vector<2x4x5xf32>, vector<2x5x16xf32>, vector<2x4x16xf32> -> vector<2x4x16xf32>
    "tpu.trace_stop"() : () -> ()
    %8 = vector.shape_cast %3 : vector<1x4xf32> to vector<1x4x1xf32>
    %9 = vector.broadcast %8 : vector<1x4x1xf32> to vector<2x4x16xf32>
    %10 = arith.addf %7, %9 : vector<2x4x16xf32>
    %cst_7 = arith.constant 0.000000e+00 : f32
    %11 = vector.broadcast %cst_7 : f32 to vector<2x4x16xf32>
    %12 = arith.subf %11, %10 : vector<2x4x16xf32>
    %13 = math.exp %12 : vector<2x4x16xf32>
    %cst_8 = arith.constant 1.000000e+00 : f32
    %14 = vector.broadcast %cst_8 : f32 to vector<2x4x16xf32>
    %15 = arith.addf %14, %13 : vector<2x4x16xf32>
    %16 = tpu.reciprocal %15 {approx = true} : vector<2x4x16xf32> -> vector<2x4x16xf32>
    %c16 = arith.constant 16 : index
    %c0_9 = arith.constant 0 : index
    %17 = vector.load %arg4[%c16, %c0_9] : memref<224x128xf32, #tpu.memory_space<vmem>>, vector<8x16xf32>
    %c24 = arith.constant 24 : index
    %c0_10 = arith.constant 0 : index
    %18 = vector.load %arg4[%c24, %c0_10] : memref<224x128xf32, #tpu.memory_space<vmem>>, vector<1x8xf32>
    %19 = vector.shape_cast %17 : vector<8x16xf32> to vector<1x8x16xf32>
    %20 = vector.shape_cast %19 : vector<1x8x16xf32> to vector<1x8x16xf32>
    %21 = vector.broadcast %20 : vector<1x8x16xf32> to vector<2x8x16xf32>
    "tpu.trace_start"() <{level = 10 : i32, message = "bhd,bld->bhl"}> : () -> ()
    %cst_11 = arith.constant dense<0.000000e+00> : vector<2x8x5xf32>
    %22 = tpu.matmul %21, %0, %cst_11 {dimension_numbers = #tpu.dot_dimension_numbers<[2], [2], [1], [1], [0, 0, 0, 1, 1, 1], [0], [0]>} : vector<2x8x16xf32>, vector<2x5x16xf32>, vector<2x8x5xf32> -> vector<2x8x5xf32>
    "tpu.trace_stop"() : () -> ()
    %23 = vector.shape_cast %18 : vector<1x8xf32> to vector<1x8x1xf32>
    %24 = vector.broadcast %23 : vector<1x8x1xf32> to vector<2x8x5xf32>
    %25 = arith.addf %22, %24 : vector<2x8x5xf32>
    %cst_12 = arith.constant 0.000000e+00 : f32
    %26 = vector.broadcast %cst_12 : f32 to vector<2x8x5xf32>
    %27 = arith.subf %26, %25 : vector<2x8x5xf32>
    %28 = math.exp %27 : vector<2x8x5xf32>
    %cst_13 = arith.constant 1.000000e+00 : f32
    %29 = vector.broadcast %cst_13 : f32 to vector<2x8x5xf32>
    %30 = arith.addf %29, %28 : vector<2x8x5xf32>
    %31 = tpu.reciprocal %30 {approx = true} : vector<2x8x5xf32> -> vector<2x8x5xf32>
    %c32 = arith.constant 32 : index
    %c0_14 = arith.constant 0 : index
    %32 = vector.load %arg4[%c32, %c0_14] : memref<224x128xf32, #tpu.memory_space<vmem>>, vector<1x4xf32>
    %c40 = arith.constant 40 : index
    %c0_15 = arith.constant 0 : index
    %33 = vector.load %arg4[%c40, %c0_15] : memref<224x128xf32, #tpu.memory_space<vmem>>, vector<1x4xf32>
    %34 = vector.shape_cast %1 : vector<2x16xf32> to vector<2x1x16xf32>
    %35 = vector.shape_cast %32 : vector<1x4xf32> to vector<1x4x1xf32>
    %36 = vector.broadcast %34 : vector<2x1x16xf32> to vector<2x4x16xf32>
    %37 = vector.broadcast %35 : vector<1x4x1xf32> to vector<2x4x16xf32>
    %38 = arith.mulf %36, %37 : vector<2x4x16xf32>
    %39 = vector.shape_cast %33 : vector<1x4xf32> to vector<1x4x1xf32>
    %40 = vector.broadcast %39 : vector<1x4x1xf32> to vector<2x4x16xf32>
    %41 = arith.addf %38, %40 : vector<2x4x16xf32>
    %cst_16 = arith.constant 0.000000e+00 : f32
    %42 = vector.broadcast %cst_16 : f32 to vector<2x4x16xf32>
    %43 = arith.subf %42, %41 : vector<2x4x16xf32>
    %44 = math.exp %43 : vector<2x4x16xf32>
    %cst_17 = arith.constant 1.000000e+00 : f32
    %45 = vector.broadcast %cst_17 : f32 to vector<2x4x16xf32>
    %46 = arith.addf %45, %44 : vector<2x4x16xf32>
    %47 = tpu.reciprocal %46 {approx = true} : vector<2x4x16xf32> -> vector<2x4x16xf32>
    %c48 = arith.constant 48 : index
    %c0_18 = arith.constant 0 : index
    %48 = vector.load %arg4[%c48, %c0_18] : memref<224x128xf32, #tpu.memory_space<vmem>>, vector<16x8xf32>
    %c64 = arith.constant 64 : index
    %c0_19 = arith.constant 0 : index
    %49 = vector.load %arg4[%c64, %c0_19] : memref<224x128xf32, #tpu.memory_space<vmem>>, vector<1x8xf32>
    %cst_20 = arith.constant dense<0.000000e+00> : vector<2x8xf32>
    %50 = tpu.matmul %1, %48, %cst_20 {dimension_numbers = #tpu.dot_dimension_numbers<[1], [0], [0], [1], [0, 0, 1, 1], [], []>} : vector<2x16xf32>, vector<16x8xf32>, vector<2x8xf32> -> vector<2x8xf32>
    %51 = vector.broadcast %49 : vector<1x8xf32> to vector<2x8xf32>
    %52 = arith.addf %50, %51 : vector<2x8xf32>
    %cst_21 = arith.constant 0.000000e+00 : f32
    %53 = vector.broadcast %cst_21 : f32 to vector<2x8xf32>
    %54 = arith.subf %53, %52 : vector<2x8xf32>
    %55 = math.exp %54 : vector<2x8xf32>
    %cst_22 = arith.constant 1.000000e+00 : f32
    %56 = vector.broadcast %cst_22 : f32 to vector<2x8xf32>
    %57 = arith.addf %56, %55 : vector<2x8xf32>
    %58 = tpu.reciprocal %57 {approx = true} : vector<2x8xf32> -> vector<2x8xf32>
    %c80 = arith.constant 80 : index
    %c0_23 = arith.constant 0 : index
    %59 = vector.load %arg4[%c80, %c0_23] : memref<224x128xf32, #tpu.memory_space<vmem>>, vector<16x4xf32>
    %60 = vector.shape_cast %59 : vector<16x4xf32> to vector<1x16x4xf32>
    %61 = vector.shape_cast %60 : vector<1x16x4xf32> to vector<1x16x4xf32>
    %62 = vector.broadcast %61 : vector<1x16x4xf32> to vector<2x16x4xf32>
    %cst_24 = arith.constant dense<0.000000e+00> : vector<2x16xf32>
    %63 = vector.multi_reduction <add>, %16, %cst_24 [1] : vector<2x4x16xf32> to vector<2x16xf32>
    %cst_25 = arith.constant 0.000000e+00 : f32
    %64 = vector.broadcast %cst_25 : f32 to vector<2x4x4xf32>
    %65 = math.exp %64 : vector<2x4x4xf32>
    %cst_26 = arith.constant dense<0.000000e+00> : vector<2x4xf32>
    %66 = vector.multi_reduction <add>, %65, %cst_26 [1] : vector<2x4x4xf32> to vector<2x4xf32>
    %67 = vector.shape_cast %66 : vector<2x4xf32> to vector<2x1x4xf32>
    %68 = tpu.reciprocal %67 {approx = true} : vector<2x1x4xf32> -> vector<2x1x4xf32>
    %69 = vector.broadcast %68 : vector<2x1x4xf32> to vector<2x4x4xf32>
    %70 = arith.mulf %65, %69 : vector<2x4x4xf32>
    "tpu.trace_start"() <{level = 10 : i32, message = "bcj,bij->bci"}> : () -> ()
    %cst_27 = arith.constant dense<0.000000e+00> : vector<2x4x16xf32>
    %71 = tpu.matmul %70, %62, %cst_27 {dimension_numbers = #tpu.dot_dimension_numbers<[2], [2], [1], [1], [0, 0, 0, 1, 1, 1], [0], [0]>} : vector<2x4x4xf32>, vector<2x16x4xf32>, vector<2x4x16xf32> -> vector<2x4x16xf32>
    "tpu.trace_stop"() : () -> ()
    %72 = vector.shape_cast %63 : vector<2x16xf32> to vector<2x1x16xf32>
    %73 = vector.broadcast %72 : vector<2x1x16xf32> to vector<2x4x16xf32>
    %74 = arith.mulf %73, %71 : vector<2x4x16xf32>
    %75 = arith.mulf %74, %74 : vector<2x4x16xf32>
    %cst_28 = arith.constant dense<0.000000e+00> : vector<2x4xf32>
    %76 = vector.multi_reduction <add>, %75, %cst_28 [2] : vector<2x4x16xf32> to vector<2x4xf32>
    %77 = vector.shape_cast %76 : vector<2x4xf32> to vector<2x4x1xf32>
    %cst_29 = arith.constant 1.000000e+00 : f32
    %78 = vector.broadcast %cst_29 : f32 to vector<2x4x1xf32>
    %79 = arith.addf %78, %77 : vector<2x4x1xf32>
    %80 = tpu.reciprocal %79 {approx = true} : vector<2x4x1xf32> -> vector<2x4x1xf32>
    %81 = arith.mulf %77, %80 : vector<2x4x1xf32>
    %cst_30 = arith.constant 9.99999996E-13 : f32
    %82 = vector.broadcast %cst_30 : f32 to vector<2x4x1xf32>
    %83 = arith.addf %77, %82 : vector<2x4x1xf32>
    %84 = math.rsqrt %83 : vector<2x4x1xf32>
    %85 = arith.mulf %81, %84 : vector<2x4x1xf32>
    %86 = vector.broadcast %85 : vector<2x4x1xf32> to vector<2x4x16xf32>
    %87 = arith.mulf %86, %74 : vector<2x4x16xf32>
    %88 = vector.shape_cast %63 : vector<2x16xf32> to vector<2x1x16xf32>
    %89 = vector.broadcast %88 : vector<2x1x16xf32> to vector<2x4x16xf32>
    %90 = arith.mulf %89, %87 : vector<2x4x16xf32>
    "tpu.trace_start"() <{level = 10 : i32, message = "bci,bij->bcj"}> : () -> ()
    %cst_31 = arith.constant dense<0.000000e+00> : vector<2x4x4xf32>
    %91 = tpu.matmul %90, %62, %cst_31 {dimension_numbers = #tpu.dot_dimension_numbers<[2], [1], [1], [2], [0, 0, 0, 1, 1, 2], [0], [0]>} : vector<2x4x16xf32>, vector<2x16x4xf32>, vector<2x4x4xf32> -> vector<2x4x4xf32>
    "tpu.trace_stop"() : () -> ()
    %92 = arith.addf %64, %91 : vector<2x4x4xf32>
    %93 = math.exp %92 : vector<2x4x4xf32>
    %cst_32 = arith.constant dense<0.000000e+00> : vector<2x4xf32>
    %94 = vector.multi_reduction <add>, %93, %cst_32 [1] : vector<2x4x4xf32> to vector<2x4xf32>
    %95 = vector.shape_cast %94 : vector<2x4xf32> to vector<2x1x4xf32>
    %96 = tpu.reciprocal %95 {approx = true} : vector<2x1x4xf32> -> vector<2x1x4xf32>
    %97 = vector.broadcast %96 : vector<2x1x4xf32> to vector<2x4x4xf32>
    %98 = arith.mulf %93, %97 : vector<2x4x4xf32>
    "tpu.trace_start"() <{level = 10 : i32, message = "bcj,bij->bci"}> : () -> ()
    %cst_33 = arith.constant dense<0.000000e+00> : vector<2x4x16xf32>
    %99 = tpu.matmul %98, %62, %cst_33 {dimension_numbers = #tpu.dot_dimension_numbers<[2], [2], [1], [1], [0, 0, 0, 1, 1, 1], [0], [0]>} : vector<2x4x4xf32>, vector<2x16x4xf32>, vector<2x4x16xf32> -> vector<2x4x16xf32>
    "tpu.trace_stop"() : () -> ()
    %100 = vector.shape_cast %63 : vector<2x16xf32> to vector<2x1x16xf32>
    %101 = vector.broadcast %100 : vector<2x1x16xf32> to vector<2x4x16xf32>
    %102 = arith.mulf %101, %99 : vector<2x4x16xf32>
    %103 = arith.mulf %102, %102 : vector<2x4x16xf32>
    %cst_34 = arith.constant dense<0.000000e+00> : vector<2x4xf32>
    %104 = vector.multi_reduction <add>, %103, %cst_34 [2] : vector<2x4x16xf32> to vector<2x4xf32>
    %105 = vector.shape_cast %104 : vector<2x4xf32> to vector<2x4x1xf32>
    %cst_35 = arith.constant 1.000000e+00 : f32
    %106 = vector.broadcast %cst_35 : f32 to vector<2x4x1xf32>
    %107 = arith.addf %106, %105 : vector<2x4x1xf32>
    %108 = tpu.reciprocal %107 {approx = true} : vector<2x4x1xf32> -> vector<2x4x1xf32>
    %109 = arith.mulf %105, %108 : vector<2x4x1xf32>
    %cst_36 = arith.constant 9.99999996E-13 : f32
    %110 = vector.broadcast %cst_36 : f32 to vector<2x4x1xf32>
    %111 = arith.addf %105, %110 : vector<2x4x1xf32>
    %112 = math.rsqrt %111 : vector<2x4x1xf32>
    %113 = arith.mulf %109, %112 : vector<2x4x1xf32>
    %114 = vector.broadcast %113 : vector<2x4x1xf32> to vector<2x4x16xf32>
    %115 = arith.mulf %114, %102 : vector<2x4x16xf32>
    %116 = vector.shape_cast %63 : vector<2x16xf32> to vector<2x1x16xf32>
    %117 = vector.broadcast %116 : vector<2x1x16xf32> to vector<2x4x16xf32>
    %118 = arith.mulf %117, %115 : vector<2x4x16xf32>
    "tpu.trace_start"() <{level = 10 : i32, message = "bci,bij->bcj"}> : () -> ()
    %cst_37 = arith.constant dense<0.000000e+00> : vector<2x4x4xf32>
    %119 = tpu.matmul %118, %62, %cst_37 {dimension_numbers = #tpu.dot_dimension_numbers<[2], [1], [1], [2], [0, 0, 0, 1, 1, 2], [0], [0]>} : vector<2x4x16xf32>, vector<2x16x4xf32>, vector<2x4x4xf32> -> vector<2x4x4xf32>
    "tpu.trace_stop"() : () -> ()
    %120 = arith.addf %92, %119 : vector<2x4x4xf32>
    %121 = math.exp %120 : vector<2x4x4xf32>
    %cst_38 = arith.constant dense<0.000000e+00> : vector<2x4xf32>
    %122 = vector.multi_reduction <add>, %121, %cst_38 [1] : vector<2x4x4xf32> to vector<2x4xf32>
    %123 = vector.shape_cast %122 : vector<2x4xf32> to vector<2x1x4xf32>
    %124 = tpu.reciprocal %123 {approx = true} : vector<2x1x4xf32> -> vector<2x1x4xf32>
    %125 = vector.broadcast %124 : vector<2x1x4xf32> to vector<2x4x4xf32>
    %126 = arith.mulf %121, %125 : vector<2x4x4xf32>
    "tpu.trace_start"() <{level = 10 : i32, message = "bcj,bij->bci"}> : () -> ()
    %cst_39 = arith.constant dense<0.000000e+00> : vector<2x4x16xf32>
    %127 = tpu.matmul %126, %62, %cst_39 {dimension_numbers = #tpu.dot_dimension_numbers<[2], [2], [1], [1], [0, 0, 0, 1, 1, 1], [0], [0]>} : vector<2x4x4xf32>, vector<2x16x4xf32>, vector<2x4x16xf32> -> vector<2x4x16xf32>
    "tpu.trace_stop"() : () -> ()
    %128 = vector.shape_cast %63 : vector<2x16xf32> to vector<2x1x16xf32>
    %129 = vector.broadcast %128 : vector<2x1x16xf32> to vector<2x4x16xf32>
    %130 = arith.mulf %129, %127 : vector<2x4x16xf32>
    %131 = arith.mulf %130, %130 : vector<2x4x16xf32>
    %cst_40 = arith.constant dense<0.000000e+00> : vector<2x4xf32>
    %132 = vector.multi_reduction <add>, %131, %cst_40 [2] : vector<2x4x16xf32> to vector<2x4xf32>
    %133 = vector.shape_cast %132 : vector<2x4xf32> to vector<2x4x1xf32>
    %cst_41 = arith.constant 1.000000e+00 : f32
    %134 = vector.broadcast %cst_41 : f32 to vector<2x4x1xf32>
    %135 = arith.addf %134, %133 : vector<2x4x1xf32>
    %136 = tpu.reciprocal %135 {approx = true} : vector<2x4x1xf32> -> vector<2x4x1xf32>
    %137 = arith.mulf %133, %136 : vector<2x4x1xf32>
    %cst_42 = arith.constant 9.99999996E-13 : f32
    %138 = vector.broadcast %cst_42 : f32 to vector<2x4x1xf32>
    %139 = arith.addf %133, %138 : vector<2x4x1xf32>
    %140 = math.rsqrt %139 : vector<2x4x1xf32>
    %141 = arith.mulf %137, %140 : vector<2x4x1xf32>
    %142 = vector.broadcast %141 : vector<2x4x1xf32> to vector<2x4x16xf32>
    %143 = arith.mulf %142, %130 : vector<2x4x16xf32>
    %c72 = arith.constant 72 : index
    %c0_43 = arith.constant 0 : index
    %144 = vector.load %arg4[%c72, %c0_43] : memref<224x128xf32, #tpu.memory_space<vmem>>, vector<8x16xf32>
    %145 = vector.shape_cast %144 : vector<8x16xf32> to vector<1x8x16xf32>
    %146 = vector.shape_cast %145 : vector<1x8x16xf32> to vector<1x8x16xf32>
    %147 = vector.broadcast %146 : vector<1x8x16xf32> to vector<2x8x16xf32>
    %cst_44 = arith.constant dense<0.000000e+00> : vector<2x8xf32>
    %148 = vector.multi_reduction <add>, %31, %cst_44 [2] : vector<2x8x5xf32> to vector<2x8xf32>
    %cst_45 = arith.constant 0.000000e+00 : f32
    %149 = vector.broadcast %cst_45 : f32 to vector<2x5x16xf32>
    %150 = math.exp %149 : vector<2x5x16xf32>
    %cst_46 = arith.constant dense<0.000000e+00> : vector<2x16xf32>
    %151 = vector.multi_reduction <add>, %150, %cst_46 [1] : vector<2x5x16xf32> to vector<2x16xf32>
    %152 = vector.shape_cast %151 : vector<2x16xf32> to vector<2x1x16xf32>
    %153 = tpu.reciprocal %152 {approx = true} : vector<2x1x16xf32> -> vector<2x1x16xf32>
    %154 = vector.broadcast %153 : vector<2x1x16xf32> to vector<2x5x16xf32>
    %155 = arith.mulf %150, %154 : vector<2x5x16xf32>
    "tpu.trace_start"() <{level = 10 : i32, message = "bcj,bij->bci"}> : () -> ()
    %cst_47 = arith.constant dense<0.000000e+00> : vector<2x5x8xf32>
    %156 = tpu.matmul %155, %147, %cst_47 {dimension_numbers = #tpu.dot_dimension_numbers<[2], [2], [1], [1], [0, 0, 0, 1, 1, 1], [0], [0]>} : vector<2x5x16xf32>, vector<2x8x16xf32>, vector<2x5x8xf32> -> vector<2x5x8xf32>
    "tpu.trace_stop"() : () -> ()
    %157 = vector.shape_cast %148 : vector<2x8xf32> to vector<2x1x8xf32>
    %158 = vector.broadcast %157 : vector<2x1x8xf32> to vector<2x5x8xf32>
    %159 = arith.mulf %158, %156 : vector<2x5x8xf32>
    %160 = arith.mulf %159, %159 : vector<2x5x8xf32>
    %cst_48 = arith.constant dense<0.000000e+00> : vector<2x5xf32>
    %161 = vector.multi_reduction <add>, %160, %cst_48 [2] : vector<2x5x8xf32> to vector<2x5xf32>
    %162 = vector.shape_cast %161 : vector<2x5xf32> to vector<2x5x1xf32>
    %cst_49 = arith.constant 1.000000e+00 : f32
    %163 = vector.broadcast %cst_49 : f32 to vector<2x5x1xf32>
    %164 = arith.addf %163, %162 : vector<2x5x1xf32>
    %165 = tpu.reciprocal %164 {approx = true} : vector<2x5x1xf32> -> vector<2x5x1xf32>
    %166 = arith.mulf %162, %165 : vector<2x5x1xf32>
    %cst_50 = arith.constant 9.99999996E-13 : f32
    %167 = vector.broadcast %cst_50 : f32 to vector<2x5x1xf32>
    %168 = arith.addf %162, %167 : vector<2x5x1xf32>
    %169 = math.rsqrt %168 : vector<2x5x1xf32>
    %170 = arith.mulf %166, %169 : vector<2x5x1xf32>
    %171 = vector.broadcast %170 : vector<2x5x1xf32> to vector<2x5x8xf32>
    %172 = arith.mulf %171, %159 : vector<2x5x8xf32>
    %173 = vector.shape_cast %148 : vector<2x8xf32> to vector<2x1x8xf32>
    %174 = vector.broadcast %173 : vector<2x1x8xf32> to vector<2x5x8xf32>
    %175 = arith.mulf %174, %172 : vector<2x5x8xf32>
    "tpu.trace_start"() <{level = 10 : i32, message = "bci,bij->bcj"}> : () -> ()
    %cst_51 = arith.constant dense<0.000000e+00> : vector<2x5x16xf32>
    %176 = tpu.matmul %175, %147, %cst_51 {dimension_numbers = #tpu.dot_dimension_numbers<[2], [1], [1], [2], [0, 0, 0, 1, 1, 2], [0], [0]>} : vector<2x5x8xf32>, vector<2x8x16xf32>, vector<2x5x16xf32> -> vector<2x5x16xf32>
    "tpu.trace_stop"() : () -> ()
    %177 = arith.addf %149, %176 : vector<2x5x16xf32>
    %178 = math.exp %177 : vector<2x5x16xf32>
    %cst_52 = arith.constant dense<0.000000e+00> : vector<2x16xf32>
    %179 = vector.multi_reduction <add>, %178, %cst_52 [1] : vector<2x5x16xf32> to vector<2x16xf32>
    %180 = vector.shape_cast %179 : vector<2x16xf32> to vector<2x1x16xf32>
    %181 = tpu.reciprocal %180 {approx = true} : vector<2x1x16xf32> -> vector<2x1x16xf32>
    %182 = vector.broadcast %181 : vector<2x1x16xf32> to vector<2x5x16xf32>
    %183 = arith.mulf %178, %182 : vector<2x5x16xf32>
    "tpu.trace_start"() <{level = 10 : i32, message = "bcj,bij->bci"}> : () -> ()
    %cst_53 = arith.constant dense<0.000000e+00> : vector<2x5x8xf32>
    %184 = tpu.matmul %183, %147, %cst_53 {dimension_numbers = #tpu.dot_dimension_numbers<[2], [2], [1], [1], [0, 0, 0, 1, 1, 1], [0], [0]>} : vector<2x5x16xf32>, vector<2x8x16xf32>, vector<2x5x8xf32> -> vector<2x5x8xf32>
    "tpu.trace_stop"() : () -> ()
    %185 = vector.shape_cast %148 : vector<2x8xf32> to vector<2x1x8xf32>
    %186 = vector.broadcast %185 : vector<2x1x8xf32> to vector<2x5x8xf32>
    %187 = arith.mulf %186, %184 : vector<2x5x8xf32>
    %188 = arith.mulf %187, %187 : vector<2x5x8xf32>
    %cst_54 = arith.constant dense<0.000000e+00> : vector<2x5xf32>
    %189 = vector.multi_reduction <add>, %188, %cst_54 [2] : vector<2x5x8xf32> to vector<2x5xf32>
    %190 = vector.shape_cast %189 : vector<2x5xf32> to vector<2x5x1xf32>
    %cst_55 = arith.constant 1.000000e+00 : f32
    %191 = vector.broadcast %cst_55 : f32 to vector<2x5x1xf32>
    %192 = arith.addf %191, %190 : vector<2x5x1xf32>
    %193 = tpu.reciprocal %192 {approx = true} : vector<2x5x1xf32> -> vector<2x5x1xf32>
    %194 = arith.mulf %190, %193 : vector<2x5x1xf32>
    %cst_56 = arith.constant 9.99999996E-13 : f32
    %195 = vector.broadcast %cst_56 : f32 to vector<2x5x1xf32>
    %196 = arith.addf %190, %195 : vector<2x5x1xf32>
    %197 = math.rsqrt %196 : vector<2x5x1xf32>
    %198 = arith.mulf %194, %197 : vector<2x5x1xf32>
    %199 = vector.broadcast %198 : vector<2x5x1xf32> to vector<2x5x8xf32>
    %200 = arith.mulf %199, %187 : vector<2x5x8xf32>
    %201 = vector.shape_cast %148 : vector<2x8xf32> to vector<2x1x8xf32>
    %202 = vector.broadcast %201 : vector<2x1x8xf32> to vector<2x5x8xf32>
    %203 = arith.mulf %202, %200 : vector<2x5x8xf32>
    "tpu.trace_start"() <{level = 10 : i32, message = "bci,bij->bcj"}> : () -> ()
    %cst_57 = arith.constant dense<0.000000e+00> : vector<2x5x16xf32>
    %204 = tpu.matmul %203, %147, %cst_57 {dimension_numbers = #tpu.dot_dimension_numbers<[2], [1], [1], [2], [0, 0, 0, 1, 1, 2], [0], [0]>} : vector<2x5x8xf32>, vector<2x8x16xf32>, vector<2x5x16xf32> -> vector<2x5x16xf32>
    "tpu.trace_stop"() : () -> ()
    %205 = arith.addf %177, %204 : vector<2x5x16xf32>
    %206 = math.exp %205 : vector<2x5x16xf32>
    %cst_58 = arith.constant dense<0.000000e+00> : vector<2x16xf32>
    %207 = vector.multi_reduction <add>, %206, %cst_58 [1] : vector<2x5x16xf32> to vector<2x16xf32>
    %208 = vector.shape_cast %207 : vector<2x16xf32> to vector<2x1x16xf32>
    %209 = tpu.reciprocal %208 {approx = true} : vector<2x1x16xf32> -> vector<2x1x16xf32>
    %210 = vector.broadcast %209 : vector<2x1x16xf32> to vector<2x5x16xf32>
    %211 = arith.mulf %206, %210 : vector<2x5x16xf32>
    "tpu.trace_start"() <{level = 10 : i32, message = "bcj,bij->bci"}> : () -> ()
    %cst_59 = arith.constant dense<0.000000e+00> : vector<2x5x8xf32>
    %212 = tpu.matmul %211, %147, %cst_59 {dimension_numbers = #tpu.dot_dimension_numbers<[2], [2], [1], [1], [0, 0, 0, 1, 1, 1], [0], [0]>} : vector<2x5x16xf32>, vector<2x8x16xf32>, vector<2x5x8xf32> -> vector<2x5x8xf32>
    "tpu.trace_stop"() : () -> ()
    %213 = vector.shape_cast %148 : vector<2x8xf32> to vector<2x1x8xf32>
    %214 = vector.broadcast %213 : vector<2x1x8xf32> to vector<2x5x8xf32>
    %215 = arith.mulf %214, %212 : vector<2x5x8xf32>
    %216 = arith.mulf %215, %215 : vector<2x5x8xf32>
    %cst_60 = arith.constant dense<0.000000e+00> : vector<2x5xf32>
    %217 = vector.multi_reduction <add>, %216, %cst_60 [2] : vector<2x5x8xf32> to vector<2x5xf32>
    %218 = vector.shape_cast %217 : vector<2x5xf32> to vector<2x5x1xf32>
    %cst_61 = arith.constant 1.000000e+00 : f32
    %219 = vector.broadcast %cst_61 : f32 to vector<2x5x1xf32>
    %220 = arith.addf %219, %218 : vector<2x5x1xf32>
    %221 = tpu.reciprocal %220 {approx = true} : vector<2x5x1xf32> -> vector<2x5x1xf32>
    %222 = arith.mulf %218, %221 : vector<2x5x1xf32>
    %cst_62 = arith.constant 9.99999996E-13 : f32
    %223 = vector.broadcast %cst_62 : f32 to vector<2x5x1xf32>
    %224 = arith.addf %218, %223 : vector<2x5x1xf32>
    %225 = math.rsqrt %224 : vector<2x5x1xf32>
    %226 = arith.mulf %222, %225 : vector<2x5x1xf32>
    %227 = vector.broadcast %226 : vector<2x5x1xf32> to vector<2x5x8xf32>
    %228 = arith.mulf %227, %215 : vector<2x5x8xf32>
    %cst_63 = arith.constant 0.000000e+00 : f32
    %229 = vector.broadcast %cst_63 : f32 to vector<2x40xf32>
    %c96 = arith.constant 96 : index
    %c0_64 = arith.constant 0 : index
    %230 = vector.load %arg4[%c96, %c0_64] : memref<224x128xf32, #tpu.memory_space<vmem>>, vector<16x40xf32>
    %231 = vector.extract_strided_slice %143 {offsets = [0, 0, 0], sizes = [2, 1, 16], strides = [1, 1, 1]} : vector<2x4x16xf32> to vector<2x1x16xf32>
    %232 = vector.shape_cast %231 : vector<2x1x16xf32> to vector<2x16xf32>
    %cst_65 = arith.constant dense<0.000000e+00> : vector<2x40xf32>
    %233 = tpu.matmul %232, %230, %cst_65 {dimension_numbers = #tpu.dot_dimension_numbers<[1], [0], [0], [1], [0, 0, 1, 1], [], []>} : vector<2x16xf32>, vector<16x40xf32>, vector<2x40xf32> -> vector<2x40xf32>
    %234 = arith.addf %229, %233 : vector<2x40xf32>
    %c112 = arith.constant 112 : index
    %c0_66 = arith.constant 0 : index
    %235 = vector.load %arg4[%c112, %c0_66] : memref<224x128xf32, #tpu.memory_space<vmem>>, vector<16x40xf32>
    %236 = vector.extract_strided_slice %143 {offsets = [0, 1, 0], sizes = [2, 1, 16], strides = [1, 1, 1]} : vector<2x4x16xf32> to vector<2x1x16xf32>
    %237 = vector.shape_cast %236 : vector<2x1x16xf32> to vector<2x16xf32>
    %cst_67 = arith.constant dense<0.000000e+00> : vector<2x40xf32>
    %238 = tpu.matmul %237, %235, %cst_67 {dimension_numbers = #tpu.dot_dimension_numbers<[1], [0], [0], [1], [0, 0, 1, 1], [], []>} : vector<2x16xf32>, vector<16x40xf32>, vector<2x40xf32> -> vector<2x40xf32>
    %239 = arith.addf %234, %238 : vector<2x40xf32>
    %c128 = arith.constant 128 : index
    %c0_68 = arith.constant 0 : index
    %240 = vector.load %arg4[%c128, %c0_68] : memref<224x128xf32, #tpu.memory_space<vmem>>, vector<16x40xf32>
    %241 = vector.extract_strided_slice %143 {offsets = [0, 2, 0], sizes = [2, 1, 16], strides = [1, 1, 1]} : vector<2x4x16xf32> to vector<2x1x16xf32>
    %242 = vector.shape_cast %241 : vector<2x1x16xf32> to vector<2x16xf32>
    %cst_69 = arith.constant dense<0.000000e+00> : vector<2x40xf32>
    %243 = tpu.matmul %242, %240, %cst_69 {dimension_numbers = #tpu.dot_dimension_numbers<[1], [0], [0], [1], [0, 0, 1, 1], [], []>} : vector<2x16xf32>, vector<16x40xf32>, vector<2x40xf32> -> vector<2x40xf32>
    %244 = arith.addf %239, %243 : vector<2x40xf32>
    %c144 = arith.constant 144 : index
    %c0_70 = arith.constant 0 : index
    %245 = vector.load %arg4[%c144, %c0_70] : memref<224x128xf32, #tpu.memory_space<vmem>>, vector<16x40xf32>
    %246 = vector.extract_strided_slice %143 {offsets = [0, 3, 0], sizes = [2, 1, 16], strides = [1, 1, 1]} : vector<2x4x16xf32> to vector<2x1x16xf32>
    %247 = vector.shape_cast %246 : vector<2x1x16xf32> to vector<2x16xf32>
    %cst_71 = arith.constant dense<0.000000e+00> : vector<2x40xf32>
    %248 = tpu.matmul %247, %245, %cst_71 {dimension_numbers = #tpu.dot_dimension_numbers<[1], [0], [0], [1], [0, 0, 1, 1], [], []>} : vector<2x16xf32>, vector<16x40xf32>, vector<2x40xf32> -> vector<2x40xf32>
    %249 = arith.addf %244, %248 : vector<2x40xf32>
    %250 = vector.extract_strided_slice %228 {offsets = [0, 0, 0], sizes = [2, 1, 8], strides = [1, 1, 1]} : vector<2x5x8xf32> to vector<2x1x8xf32>
    %251 = vector.shape_cast %250 : vector<2x1x8xf32> to vector<2x8xf32>
    %c0_72 = arith.constant 0 : index
    %c0_73 = arith.constant 0 : index
    %252 = vector.load %arg6[%c0_72, %c0_73] : memref<2x64xf32, #tpu.memory_space<vmem>>, vector<2x8xf32>
    tpu.vector_store %arg6[%c0_72, %c0_73], %251 {strides = array<i32>} : memref<2x64xf32, #tpu.memory_space<vmem>>, vector<2x8xf32>,
    %253 = vector.extract_strided_slice %228 {offsets = [0, 1, 0], sizes = [2, 1, 8], strides = [1, 1, 1]} : vector<2x5x8xf32> to vector<2x1x8xf32>
    %254 = vector.shape_cast %253 : vector<2x1x8xf32> to vector<2x8xf32>
    %c0_74 = arith.constant 0 : index
    %c8_75 = arith.constant 8 : index
    %255 = vector.load %arg6[%c0_74, %c8_75] : memref<2x64xf32, #tpu.memory_space<vmem>>, vector<2x8xf32>
    tpu.vector_store %arg6[%c0_74, %c8_75], %254 {strides = array<i32>} : memref<2x64xf32, #tpu.memory_space<vmem>>, vector<2x8xf32>,
    %256 = vector.extract_strided_slice %228 {offsets = [0, 2, 0], sizes = [2, 1, 8], strides = [1, 1, 1]} : vector<2x5x8xf32> to vector<2x1x8xf32>
    %257 = vector.shape_cast %256 : vector<2x1x8xf32> to vector<2x8xf32>
    %c0_76 = arith.constant 0 : index
    %c16_77 = arith.constant 16 : index
    %258 = vector.load %arg6[%c0_76, %c16_77] : memref<2x64xf32, #tpu.memory_space<vmem>>, vector<2x8xf32>
    tpu.vector_store %arg6[%c0_76, %c16_77], %257 {strides = array<i32>} : memref<2x64xf32, #tpu.memory_space<vmem>>, vector<2x8xf32>,
    %259 = vector.extract_strided_slice %228 {offsets = [0, 3, 0], sizes = [2, 1, 8], strides = [1, 1, 1]} : vector<2x5x8xf32> to vector<2x1x8xf32>
    %260 = vector.shape_cast %259 : vector<2x1x8xf32> to vector<2x8xf32>
    %c0_78 = arith.constant 0 : index
    %c24_79 = arith.constant 24 : index
    %261 = vector.load %arg6[%c0_78, %c24_79] : memref<2x64xf32, #tpu.memory_space<vmem>>, vector<2x8xf32>
    tpu.vector_store %arg6[%c0_78, %c24_79], %260 {strides = array<i32>} : memref<2x64xf32, #tpu.memory_space<vmem>>, vector<2x8xf32>,
    %262 = vector.extract_strided_slice %228 {offsets = [0, 4, 0], sizes = [2, 1, 8], strides = [1, 1, 1]} : vector<2x5x8xf32> to vector<2x1x8xf32>
    %263 = vector.shape_cast %262 : vector<2x1x8xf32> to vector<2x8xf32>
    %c0_80 = arith.constant 0 : index
    %c32_81 = arith.constant 32 : index
    %264 = vector.load %arg6[%c0_80, %c32_81] : memref<2x64xf32, #tpu.memory_space<vmem>>, vector<2x8xf32>
    tpu.vector_store %arg6[%c0_80, %c32_81], %263 {strides = array<i32>} : memref<2x64xf32, #tpu.memory_space<vmem>>, vector<2x8xf32>,
    %c0_82 = arith.constant 0 : index
    %c0_83 = arith.constant 0 : index
    %265 = vector.load %arg6[%c0_82, %c0_83] : memref<2x64xf32, #tpu.memory_space<vmem>>, vector<2x40xf32>
    %266 = arith.addf %249, %265 : vector<2x40xf32>
    %cst_84 = arith.constant 0.000000e+00 : f32
    %267 = vector.broadcast %cst_84 : f32 to vector<2x40xf32>
    %268 = arith.maximumf %266, %267 : vector<2x40xf32>
    %c0_85 = arith.constant 0 : index
    %c0_86 = arith.constant 0 : index
    %269 = vector.load %arg6[%c0_85, %c0_86] : memref<2x64xf32, #tpu.memory_space<vmem>>, vector<2x40xf32>
    tpu.vector_store %arg6[%c0_85, %c0_86], %268 {strides = array<i32>} : memref<2x64xf32, #tpu.memory_space<vmem>>, vector<2x40xf32>,
    %c160 = arith.constant 160 : index
    %c0_87 = arith.constant 0 : index
    %270 = vector.load %arg4[%c160, %c0_87] : memref<224x128xf32, #tpu.memory_space<vmem>>, vector<16x8xf32>
    %271 = vector.extract_strided_slice %47 {offsets = [0, 0, 0], sizes = [2, 1, 16], strides = [1, 1, 1]} : vector<2x4x16xf32> to vector<2x1x16xf32>
    %272 = vector.shape_cast %271 : vector<2x1x16xf32> to vector<2x16xf32>
    %cst_88 = arith.constant dense<0.000000e+00> : vector<2x8xf32>
    %273 = tpu.matmul %272, %270, %cst_88 {dimension_numbers = #tpu.dot_dimension_numbers<[1], [0], [0], [1], [0, 0, 1, 1], [], []>} : vector<2x16xf32>, vector<16x8xf32>, vector<2x8xf32> -> vector<2x8xf32>
    %274 = arith.addf %58, %273 : vector<2x8xf32>
    %c176 = arith.constant 176 : index
    %c0_89 = arith.constant 0 : index
    %275 = vector.load %arg4[%c176, %c0_89] : memref<224x128xf32, #tpu.memory_space<vmem>>, vector<16x8xf32>
    %276 = vector.extract_strided_slice %47 {offsets = [0, 1, 0], sizes = [2, 1, 16], strides = [1, 1, 1]} : vector<2x4x16xf32> to vector<2x1x16xf32>
    %277 = vector.shape_cast %276 : vector<2x1x16xf32> to vector<2x16xf32>
    %cst_90 = arith.constant dense<0.000000e+00> : vector<2x8xf32>
    %278 = tpu.matmul %277, %275, %cst_90 {dimension_numbers = #tpu.dot_dimension_numbers<[1], [0], [0], [1], [0, 0, 1, 1], [], []>} : vector<2x16xf32>, vector<16x8xf32>, vector<2x8xf32> -> vector<2x8xf32>
    %279 = arith.addf %274, %278 : vector<2x8xf32>
    %c192 = arith.constant 192 : index
    %c0_91 = arith.constant 0 : index
    %280 = vector.load %arg4[%c192, %c0_91] : memref<224x128xf32, #tpu.memory_space<vmem>>, vector<16x8xf32>
    %281 = vector.extract_strided_slice %47 {offsets = [0, 2, 0], sizes = [2, 1, 16], strides = [1, 1, 1]} : vector<2x4x16xf32> to vector<2x1x16xf32>
    %282 = vector.shape_cast %281 : vector<2x1x16xf32> to vector<2x16xf32>
    %cst_92 = arith.constant dense<0.000000e+00> : vector<2x8xf32>
    %283 = tpu.matmul %282, %280, %cst_92 {dimension_numbers = #tpu.dot_dimension_numbers<[1], [0], [0], [1], [0, 0, 1, 1], [], []>} : vector<2x16xf32>, vector<16x8xf32>, vector<2x8xf32> -> vector<2x8xf32>
    %284 = arith.addf %279, %283 : vector<2x8xf32>
    %c208 = arith.constant 208 : index
    %c0_93 = arith.constant 0 : index
    %285 = vector.load %arg4[%c208, %c0_93] : memref<224x128xf32, #tpu.memory_space<vmem>>, vector<16x8xf32>
    %286 = vector.extract_strided_slice %47 {offsets = [0, 3, 0], sizes = [2, 1, 16], strides = [1, 1, 1]} : vector<2x4x16xf32> to vector<2x1x16xf32>
    %287 = vector.shape_cast %286 : vector<2x1x16xf32> to vector<2x16xf32>
    %cst_94 = arith.constant dense<0.000000e+00> : vector<2x8xf32>
    %288 = tpu.matmul %287, %285, %cst_94 {dimension_numbers = #tpu.dot_dimension_numbers<[1], [0], [0], [1], [0, 0, 1, 1], [], []>} : vector<2x16xf32>, vector<16x8xf32>, vector<2x8xf32> -> vector<2x8xf32>
    %289 = arith.addf %284, %288 : vector<2x8xf32>
    %c0_95 = arith.constant 0 : index
    %c40_96 = arith.constant 40 : index
    %290 = vector.load %arg6[%c0_95, %c40_96] : memref<2x64xf32, #tpu.memory_space<vmem>>, vector<2x16xf32>
    tpu.vector_store %arg6[%c0_95, %c40_96], %1 {strides = array<i32>} : memref<2x64xf32, #tpu.memory_space<vmem>>, vector<2x16xf32>,
    %cst_97 = arith.constant 0.000000e+00 : f32
    %291 = vector.broadcast %cst_97 : f32 to vector<2x8xf32>
    %292 = arith.subf %291, %289 : vector<2x8xf32>
    %293 = math.exp %292 : vector<2x8xf32>
    %cst_98 = arith.constant 1.000000e+00 : f32
    %294 = vector.broadcast %cst_98 : f32 to vector<2x8xf32>
    %295 = arith.addf %294, %293 : vector<2x8xf32>
    %296 = tpu.reciprocal %295 {approx = true} : vector<2x8xf32> -> vector<2x8xf32>
    %c0_99 = arith.constant 0 : index
    %c56 = arith.constant 56 : index
    %297 = vector.load %arg6[%c0_99, %c56] : memref<2x64xf32, #tpu.memory_space<vmem>>, vector<2x8xf32>
    tpu.vector_store %arg6[%c0_99, %c56], %296 {strides = array<i32>} : memref<2x64xf32, #tpu.memory_space<vmem>>, vector<2x8xf32>,
    %c0_100 = arith.constant 0 : index
    %c0_101 = arith.constant 0 : index
    %298 = vector.load %arg6[%c0_100, %c0_101] : memref<2x64xf32, #tpu.memory_space<vmem>>, vector<2x64xf32>
    %c0_102 = arith.constant 0 : index
    %c0_103 = arith.constant 0 : index
    %299 = vector.load %arg3[%c0_102, %c0_103] : memref<2x3xf32, #tpu.memory_space<vmem>>, vector<2x3xf32>
    %c0_104 = arith.constant 0 : index
    %c0_105 = arith.constant 0 : index
    %c0_106 = arith.constant 0 : index
    %300 = vector.load %arg2[%c0_104, %c0_105, %c0_106] : memref<2x3x64xf32, #tpu.memory_space<vmem>>, vector<2x3x64xf32>
    %301 = vector.shape_cast %298 : vector<2x64xf32> to vector<2x1x64xf32>
    %302 = vector.broadcast %301 : vector<2x1x64xf32> to vector<2x3x64xf32>
    %303 = arith.mulf %300, %302 : vector<2x3x64xf32>
    %cst_107 = arith.constant dense<0.000000e+00> : vector<2x3xf32>
    %304 = vector.multi_reduction <add>, %303, %cst_107 [2] : vector<2x3x64xf32> to vector<2x3xf32>
    %305 = arith.addf %299, %304 : vector<2x3xf32>
    %c0_108 = arith.constant 0 : index
    %c0_109 = arith.constant 0 : index
    %306 = vector.load %arg5[%c0_108, %c0_109] : memref<2x3xf32, #tpu.memory_space<vmem>>, vector<2x3xf32>
    tpu.vector_store %arg5[%c0_108, %c0_109], %305 {strides = array<i32>} : memref<2x3xf32, #tpu.memory_space<vmem>>, vector<2x3xf32>,
    return
  }
}

</mosaic_0001>

<llo_original>
// kernel: squeeze.3
$region0: #{squeeze.3}
  %s0 = inlined_call_operand.vmem [shape: f32[6], index: 0, kind: input, shape index: {}]
  %s1 = inlined_call_operand.vmem [shape: f32[2,3], index: 1, kind: output, shape index: {}]
  $region1: #{squeeze.3} parent=0
    #allocation0 [shape = 'u8[4096]{0}', space=vmem, size = 0x1000, scoped, tag = 'scoped mem for output reshape']
    #allocation1 [shape = 'u8[4096]{0}', space=vmem, size = 0x1000, scoped, tag = 'scoped mem for input reshape']
    %s3 = ssub.s32 2, 1
    %v4 = vld [vmem:[%s0] sm:%s3]
    %5 = vst [vmem:[#allocation1] sm:%s3] %v4
    %v6 = vld [vmem:[#allocation1] sm:$0x1]
    %vm7 = vcmask 23552
    %8 = vst.msk [vmem:[#allocation0] sm:$0x1] %vm7, %v6
    %v9 = vld [vmem:[#allocation1] sm:$0x1]
    %10 = vrot.lane.b32.xlu0 %v9, 125
    %v11 = vpop.permute.xlu0 %10
    %vm12 = vcmask 23552
    %s13 = scalar_lea.vmem [#allocation0], 1
    %14 = vst.msk [vmem:[%s13] sm:$0x1] %vm12, %v11
    %s16 = ssub.s32 4, 1
    %v17 = vld [vmem:[#allocation0] sm:%s16]
    %s19 = ssub.s32 4, 1
    %20 = vst [vmem:[%s1] sm:%s19] %v17

// kernel: ccn4sr_forward.1
$region0: #{ccn4sr_forward.1}
  #allocation0 [shape = 'u32[]', space=smem, size = 0x4, offset = 0x4, fixed_abs, tag = 'smem constant byte address 0x4 - core index']
  #allocation1 [shape = 'u32[72,128]{1,0:T(1,128)}', space=vmem, size = 0x9000, scoped, tag = 'internal scratch']
  #allocation2 [shape = 'f32[2,64]{1,0:T(2,128)}', space=vmem, size = 0x400, scoped, tag = 'scratch operand']
  %s0 = inlined_call_operand.vmem [shape: f32[2,5,16], index: 0, kind: input, shape index: {}]
  %s1 = inlined_call_operand.vmem [shape: f32[2,16], index: 1, kind: input, shape index: {}]
  %s2 = inlined_call_operand.vmem [shape: f32[2,3,64], index: 2, kind: input, shape index: {}]
  %s3 = inlined_call_operand.vmem [shape: f32[2,3], index: 3, kind: input, shape index: {}]
  %s4 = inlined_call_operand.vmem [shape: f32[224,128], index: 4, kind: input, shape index: {}]
  %s5 = inlined_call_operand.hbm [shape: f32[2,3], index: 5, kind: output, shape index: {}]
  %s6 = sld [smem:[#allocation0]]
  $region30: #{ccn4sr_forward.1} parent=0
    _
  %s8 = ssub.s32 1, %s6
  %s9 = scalar_select 0, %s8, %s6
  $region1: #{ccn4sr_forward.1} parent=0
    #allocation3 [shape = 'u8[1024]{0}', space=vmem, size = 0x400, scoped, tag = 'output window, operand 0, single buffered']
    #allocation4 [shape = 's32[1]{0}', space=sflag, size = 0x4, scoped, tag = 'scoped memory for ccn4sr_forward.1']
    %10 = vsyncpa [#allocation4], 0
    // Predicated region
    $region2: #{ccn4sr_forward.1} parent=1 // pred_check
      _
    $region3: #{ccn4sr_forward.1} parent=1 // pred_check_branch
      %12 = sbr.rel (0) target = $region5
    $region4: #{ccn4sr_forward.1} parent=1 // pred_region
      _
    $region5: #{ccn4sr_forward.1} parent=1 // pred_fallthru
      _
    // Predicated region
    $region6: #{ccn4sr_forward.1} parent=1 // pred_check
      _
    $region7: #{ccn4sr_forward.1} parent=1 // pred_check_branch
      %14 = sbr.rel (0) target = $region9
    $region8: #{ccn4sr_forward.1} parent=1 // pred_region
      _
    $region9: #{ccn4sr_forward.1} parent=1 // pred_fallthru
      _
    // Predicated region
    $region10: #{ccn4sr_forward.1} parent=1 // pred_check
      _
    $region11: #{ccn4sr_forward.1} parent=1 // pred_check_branch
      %16 = sbr.rel (0) target = $region13
    $region12: #{ccn4sr_forward.1} parent=1 // pred_region
      _
    $region13: #{ccn4sr_forward.1} parent=1 // pred_fallthru
      _
    // Predicated region
    $region14: #{ccn4sr_forward.1} parent=1 // pred_check
      _
    $region15: #{ccn4sr_forward.1} parent=1 // pred_check_branch
      %18 = sbr.rel (0) target = $region17
    $region16: #{ccn4sr_forward.1} parent=1 // pred_region
      _
    $region17: #{ccn4sr_forward.1} parent=1 // pred_fallthru
      _
    // Predicated region
    $region18: #{ccn4sr_forward.1} parent=1 // pred_check
      _
    $region19: #{ccn4sr_forward.1} parent=1 // pred_check_branch
      %20 = sbr.rel (0) target = $region21
    $region20: #{ccn4sr_forward.1} parent=1 // pred_region
      _
    $region21: #{ccn4sr_forward.1} parent=1 // pred_fallthru
      _
    %v21 = vld [vmem:[%s0] sm:$0x1f]
    %v22 = vld [vmem:[%s0 + $0x8] sm:$0x1f]
    %v23 = vld [vmem:[%s1] sm:$0x3]
    %v24 = vld [vmem:[%s4] sm:$0xf]
    %v25 = vld [vmem:[%s4 + $0x8] sm:$0x1]
    %v26 = vperm.slane %v25, 0
    %v27 = vlaneseq
    %v28 = vshrl.u32 %v27, 7
    %30 = vset.pattern.permute.xlu0 %v28
    %31 = vperm.xlu0 %30, %v26
    %v32 = vpop.permute.xlu0 %31
    %vm33 = vcmask 39936
    %v35 = vsel %vm33, %v24, 0
    %vm37 = vcmask 1044480
    %v39 = vsel %vm37, %v21, 0
    %41 = vmatpush.msra.mxu0 0.0
    %42 = vmatpush.msra.mxu0 0.0
    %43 = vmatpush.msra.mxu0 0.0
    %44 = vmatpush.msra.mxu0 0.0
    %45 = vmatpush.msra.mxu0 0.0
    %46 = vmatpush.msra.mxu0 0.0
    %47 = vmatpush.msra.mxu0 0.0
    %48 = vmatpush.msra.mxu0 0.0
    %49 = vmatpush.msra.mxu0 0.0
    %50 = vmatpush.msra.mxu0 0.0
    %51 = vmatpush.msra.mxu0 0.0
    %52 = vmatpush.msra.mxu0 0.0
    %53 = vmatpush.msra.mxu0 0.0
    %54 = vmatpush.msra.mxu0 0.0
    %55 = vmatpush.msra.mxu0 0.0
    %56 = vmatpush.msra.mxu0 %v39
    %57 = vmatmul.f32.gmra.mxu0 %v35
    %v58 = vpop.f32.mrf.mxu0
    %v59 = vadd.f32 %v32, %v58
    %60 = vdwg.mxu0
    %v62 = vsel %vm37, %v22, 0
    %64 = vmatpush.msra.mxu0 0.0
    %65 = vmatpush.msra.mxu0 0.0
    %66 = vmatpush.msra.mxu0 0.0
    %67 = vmatpush.msra.mxu0 0.0
    %68 = vmatpush.msra.mxu0 0.0
    %69 = vmatpush.msra.mxu0 0.0
    %70 = vmatpush.msra.mxu0 0.0
    %71 = vmatpush.msra.mxu0 0.0
    %72 = vmatpush.msra.mxu0 0.0
    %73 = vmatpush.msra.mxu0 0.0
    %74 = vmatpush.msra.mxu0 0.0
    %75 = vmatpush.msra.mxu0 0.0
    %76 = vmatpush.msra.mxu0 0.0
    %77 = vmatpush.msra.mxu0 0.0
    %78 = vmatpush.msra.mxu0 0.0
    %79 = vmatpush.msra.mxu0 %v62
    %80 = vmatmul.f32.gmra.mxu0 %v35
    %v81 = vpop.f32.mrf.mxu0
    %v82 = vadd.f32 %v32, %v81
    %83 = vdwg.mxu0
    %v84 = vsub.f32 0.0, %v59
    %v85 = vsub.f32 0.0, %v82
    %v86 = vmul.f32 %v84, 1.442695
    %v87 = vpow.pop %v86
    %v88 = vmul.f32 %v85, 1.442695
    %v89 = vpow.pop %v88
    %v90 = vadd.f32 %v87, 1.0
    %v91 = vadd.f32 %v89, 1.0
    %v92 = vrcp.pop %v90
    %v93 = vrcp.pop %v91
    %v94 = vld [vmem:[%s4 + $0x10] sm:$0xff]
    %v95 = vld [vmem:[%s4 + $0x18] sm:$0x1]
    %v96 = vperm.slane %v95, 0
    %v97 = vlaneseq
    %v98 = vshrl.u32 %v97, 7
    %100 = vset.pattern.permute.xlu0 %v98
    %101 = vperm.xlu0 %100, %v96
    %v102 = vpop.permute.xlu0 %101
    %vm103 = vcmask 130048
    %v105 = vsel %vm103, %v94, 0
    %v107 = vsel %vm103, %v21, 0
    %109 = vmatpush.xpose.msra.mxu0 0.0
    %110 = vmatpush.xpose.msra.mxu0 0.0
    %111 = vmatpush.xpose.msra.mxu0 0.0
    %112 = vmatpush.xpose.msra.mxu0 0.0
    %113 = vmatpush.xpose.msra.mxu0 0.0
    %114 = vmatpush.xpose.msra.mxu0 0.0
    %115 = vmatpush.xpose.msra.mxu0 0.0
    %116 = vmatpush.xpose.msra.mxu0 0.0
    %117 = vmatpush.xpose.msra.mxu0 0.0
    %118 = vmatpush.xpose.msra.mxu0 0.0
    %119 = vmatpush.xpose.msra.mxu0 0.0
    %120 = vmatpush.xpose.msra.mxu0 0.0
    %121 = vmatpush.xpose.msra.mxu0 0.0
    %122 = vmatpush.xpose.msra.mxu0 0.0
    %123 = vmatpush.xpose.msra.mxu0 0.0
    %124 = vmatpush.xpose.msra.mxu0 %v107
    %125 = vmatmul.f32.gmra.mxu0 %v105
    %v126 = vpop.f32.mrf.mxu0
    %v127 = vadd.f32 %v102, %v126
    %128 = vdwg.mxu0
    %v129 = vsel %vm103, %v22, 0
    %131 = vmatpush.xpose.msra.mxu0 0.0
    %132 = vmatpush.xpose.msra.mxu0 0.0
    %133 = vmatpush.xpose.msra.mxu0 0.0
    %134 = vmatpush.xpose.msra.mxu0 0.0
    %135 = vmatpush.xpose.msra.mxu0 0.0
    %136 = vmatpush.xpose.msra.mxu0 0.0
    %137 = vmatpush.xpose.msra.mxu0 0.0
    %138 = vmatpush.xpose.msra.mxu0 0.0
    %139 = vmatpush.xpose.msra.mxu0 0.0
    %140 = vmatpush.xpose.msra.mxu0 0.0
    %141 = vmatpush.xpose.msra.mxu0 0.0
    %142 = vmatpush.xpose.msra.mxu0 0.0
    %143 = vmatpush.xpose.msra.mxu0 0.0
    %144 = vmatpush.xpose.msra.mxu0 0.0
    %145 = vmatpush.xpose.msra.mxu0 0.0
    %146 = vmatpush.xpose.msra.mxu0 %v129
    %147 = vmatmul.f32.gmra.mxu0 %v105
    %v148 = vpop.f32.mrf.mxu0
    %v149 = vadd.f32 %v102, %v148
    %150 = vdwg.mxu0
    %v151 = vsub.f32 0.0, %v127
    %v152 = vsub.f32 0.0, %v149
    %v153 = vmul.f32 %v151, 1.442695
    %v154 = vpow.pop %v153
    %v155 = vmul.f32 %v152, 1.442695
    %v156 = vpow.pop %v155
    %v157 = vadd.f32 %v154, 1.0
    %v158 = vadd.f32 %v156, 1.0
    %v159 = vrcp.pop %v157
    %v160 = vrcp.pop %v158
    %v161 = vld [vmem:[%s4 + $0x20] sm:$0x1]
    %v162 = vld [vmem:[%s4 + $0x28] sm:$0x1]
    %v164 = vrot.slane %v23, 1
    %v165 = vperm.slane %v161, 0
    %v166 = vlaneseq
    %v167 = vshrl.u32 %v166, 7
    %169 = vset.pattern.permute.xlu0 %v167
    %170 = vperm.xlu0 %169, %v165
    %v171 = vpop.permute.xlu0 %170
    %v172 = vperm.slane %v23, 0
    %v173 = vperm.slane %v164, 0
    %v176 = vmul.f32 %v172, %v171
    %v177 = vmul.f32 %v173, %v171
    %v178 = vperm.slane %v162, 0
    %v179 = vlaneseq
    %v180 = vshrl.u32 %v179, 7
    %182 = vset.pattern.permute.xlu0 %v180
    %183 = vperm.xlu0 %182, %v178
    %v184 = vpop.permute.xlu0 %183
    %v185 = vadd.f32 %v176, %v184
    %v186 = vadd.f32 %v177, %v184
    %v187 = vsub.f32 0.0, %v185
    %v188 = vsub.f32 0.0, %v186
    %v189 = vmul.f32 %v187, 1.442695
    %v190 = vpow.pop %v189
    %v191 = vmul.f32 %v188, 1.442695
    %v192 = vpow.pop %v191
    %v193 = vadd.f32 %v190, 1.0
    %v194 = vadd.f32 %v192, 1.0
    %v195 = vrcp.pop %v193
    %v196 = vrcp.pop %v194
    %v197 = vld [vmem:[%s4 + $0x30] sm:$0xff]
    %v198 = vld [vmem:[%s4 + $0x38] sm:$0xff]
    %v199 = vld [vmem:[%s4 + $0x40] sm:$0x1]
    %v200 = vperm.slane %v199, 0
    %v201 = vsel %vm103, %v23, 0
    %203 = vmatpush.msra.mxu0 0.0
    %204 = vmatpush.msra.mxu0 0.0
    %205 = vmatpush.msra.mxu0 0.0
    %206 = vmatpush.msra.mxu0 0.0
    %207 = vmatpush.msra.mxu0 0.0
    %208 = vmatpush.msra.mxu0 0.0
    %209 = vmatpush.msra.mxu0 0.0
    %210 = vmatpush.msra.mxu0 0.0
    %211 = vmatpush.msra.mxu0 0.0
    %212 = vmatpush.msra.mxu0 0.0
    %213 = vmatpush.msra.mxu0 0.0
    %214 = vmatpush.msra.mxu0 0.0
    %215 = vmatpush.msra.mxu0 0.0
    %216 = vmatpush.msra.mxu0 0.0
    %217 = vmatpush.msra.mxu0 %v198
    %218 = vmatpush.msra.mxu0 %v197
    %219 = vmatmul.f32.gmra.mxu0 %v201
    %v220 = vpop.f32.mrf.mxu0
    %v221 = vadd.f32 %v200, %v220
    %222 = vdwg.mxu0
    %v223 = vsub.f32 0.0, %v221
    %v224 = vmul.f32 %v223, 1.442695
    %v225 = vpow.pop %v224
    %v226 = vadd.f32 %v225, 1.0
    %v227 = vrcp.pop %v226
    %v228 = vld [vmem:[%s4 + $0x50] sm:$0xff]
    %v229 = vld [vmem:[%s4 + $0x58] sm:$0xff]
    %vm230 = vcmask 125952
    %v231 = vsel %vm230, %v92, 0.0
    %v232 = vrot.slane %v231, 4
    %v233 = vadd.f32 %v231, %v232
    %v234 = vrot.slane %v233, 2
    %v235 = vadd.f32 %v233, %v234
    %v236 = vrot.slane %v235, 1
    %v237 = vadd.f32 %v235, %v236
    %v238 = vsel %vm230, %v93, 0.0
    %v239 = vrot.slane %v238, 4
    %v240 = vadd.f32 %v238, %v239
    %v241 = vrot.slane %v240, 2
    %v242 = vadd.f32 %v240, %v241
    %v243 = vrot.slane %v242, 1
    %v244 = vadd.f32 %v242, %v243
    %vm245 = vcmask 1043456
    %v246 = vsel %vm245, 1.0, 0.0
    %v247 = vrot.slane %v246, 4
    %v248 = vadd.f32 %v246, %v247
    %v249 = vrot.slane %v248, 2
    %v250 = vadd.f32 %v248, %v249
    %v251 = vrot.slane %v250, 1
    %v252 = vadd.f32 %v250, %v251
    %v253 = vrcp.pop %v252
    %vm254 = vcmask 31744
    %v256 = vsel %vm254, %v253, 0
    %v259 = vsel %vm254, %v228, 0
    %v262 = vsel %vm254, %v229, 0
    %264 = vmatpush.xpose.msra.mxu0 0.0
    %265 = vmatpush.xpose.msra.mxu0 0.0
    %266 = vmatpush.xpose.msra.mxu0 0.0
    %267 = vmatpush.xpose.msra.mxu0 0.0
    %268 = vmatpush.xpose.msra.mxu0 0.0
    %269 = vmatpush.xpose.msra.mxu0 0.0
    %270 = vmatpush.xpose.msra.mxu0 0.0
    %271 = vmatpush.xpose.msra.mxu0 0.0
    %272 = vmatpush.xpose.msra.mxu0 0.0
    %273 = vmatpush.xpose.msra.mxu0 0.0
    %274 = vmatpush.xpose.msra.mxu0 0.0
    %275 = vmatpush.xpose.msra.mxu0 0.0
    %276 = vmatpush.xpose.msra.mxu0 0.0
    %277 = vmatpush.xpose.msra.mxu0 0.0
    %278 = vmatpush.xpose.msra.mxu0 %v262
    %279 = vmatpush.xpose.msra.mxu0 %v259
    %280 = vmatmul.f32.gmra.mxu0 %v256
    %v281 = vpop.f32.mrf.mxu0
    %v282 = vadd.f32 0.0, %v281
    %283 = vdwg.mxu0
    %v284 = vmul.f32 %v237, %v282
    %v285 = vmul.f32 %v244, %v282
    %v286 = vmul.f32 %v284, %v284
    %v287 = vmul.f32 %v285, %v285
    %v288 = vsel %vm230, %v286, 0.0
    %289 = vadd.xlane.f32.xlu0 %v288
    %v290 = vpop.xlane.xlu0 %289
    %v291 = vsel %vm230, %v287, 0.0
    %292 = vadd.xlane.f32.xlu0 %v291
    %v293 = vpop.xlane.xlu0 %292
    %v294 = vadd.f32 %v290, 1.0
    %v295 = vadd.f32 %v293, 1.0
    %v296 = vrcp.pop %v294
    %v297 = vrcp.pop %v295
    %v298 = vmul.f32 %v290, %v296
    %v299 = vmul.f32 %v293, %v297
    %v300 = vadd.f32 %v290, 1e-12
    %v301 = vadd.f32 %v293, 1e-12
    %v302 = vrsqrt.pop %v300
    %v303 = vmul.f32 %v302, %v300
    %v304 = vmul.f32 %v303, %v302
    %v305 = vmul.f32 0.5, %v304
    %v306 = vsub.f32 1.5, %v305
    %v307 = vmul.f32 %v302, %v306
    %vm308 = vweird.f32 %v300
    %vm309 = vweird.f32 %v302
    %vm310 = vmor %vm308, %vm309
    %v311 = vsel %vm310, %v302, %v307
    %v312 = vrsqrt.pop %v301
    %v313 = vmul.f32 %v312, %v301
    %v314 = vmul.f32 %v313, %v312
    %v315 = vmul.f32 0.5, %v314
    %v316 = vsub.f32 1.5, %v315
    %v317 = vmul.f32 %v312, %v316
    %vm318 = vweird.f32 %v301
    %vm319 = vweird.f32 %v312
    %vm320 = vmor %vm318, %vm319
    %v321 = vsel %vm320, %v312, %v317
    %v322 = vmul.f32 %v298, %v311
    %v323 = vmul.f32 %v299, %v321
    %v324 = vmul.f32 %v322, %v284
    %v325 = vmul.f32 %v323, %v285
    %v326 = vmul.f32 %v237, %v324
    %v327 = vmul.f32 %v244, %v325
    %v329 = vsel %vm103, %v326, 0
    %331 = vmatpush.msra.mxu0 0.0
    %332 = vmatpush.msra.mxu0 0.0
    %333 = vmatpush.msra.mxu0 0.0
    %334 = vmatpush.msra.mxu0 0.0
    %335 = vmatpush.msra.mxu0 0.0
    %336 = vmatpush.msra.mxu0 0.0
    %337 = vmatpush.msra.mxu0 0.0
    %338 = vmatpush.msra.mxu0 0.0
    %339 = vmatpush.msra.mxu0 0.0
    %340 = vmatpush.msra.mxu0 0.0
    %341 = vmatpush.msra.mxu0 0.0
    %342 = vmatpush.msra.mxu0 0.0
    %343 = vmatpush.msra.mxu0 0.0
    %344 = vmatpush.msra.mxu0 0.0
    %345 = vmatpush.msra.mxu0 %v229
    %346 = vmatpush.msra.mxu0 %v228
    %347 = vmatmul.f32.gmra.mxu0 %v329
    %v348 = vpop.f32.mrf.mxu0
    %v349 = vadd.f32 0.0, %v348
    %350 = vdwg.mxu0
    %v352 = vsel %vm103, %v327, 0
    %354 = vmatpush.msra.mxu0 0.0
    %355 = vmatpush.msra.mxu0 0.0
    %356 = vmatpush.msra.mxu0 0.0
    %357 = vmatpush.msra.mxu0 0.0
    %358 = vmatpush.msra.mxu0 0.0
    %359 = vmatpush.msra.mxu0 0.0
    %360 = vmatpush.msra.mxu0 0.0
    %361 = vmatpush.msra.mxu0 0.0
    %362 = vmatpush.msra.mxu0 0.0
    %363 = vmatpush.msra.mxu0 0.0
    %364 = vmatpush.msra.mxu0 0.0
    %365 = vmatpush.msra.mxu0 0.0
    %366 = vmatpush.msra.mxu0 0.0
    %367 = vmatpush.msra.mxu0 0.0
    %368 = vmatpush.msra.mxu0 %v229
    %369 = vmatpush.msra.mxu0 %v228
    %370 = vmatmul.f32.gmra.mxu0 %v352
    %v371 = vpop.f32.mrf.mxu0
    %v372 = vadd.f32 0.0, %v371
    %373 = vdwg.mxu0
    %v374 = vmul.f32 %v349, 1.442695
    %v375 = vpow.pop %v374
    %v376 = vmul.f32 %v372, 1.442695
    %v377 = vpow.pop %v376
    %vm378 = vcmask 27648
    %v379 = vsel %vm378, %v375, 0.0
    %v380 = vrot.slane %v379, 4
    %v381 = vadd.f32 %v379, %v380
    %v382 = vrot.slane %v381, 2
    %v383 = vadd.f32 %v381, %v382
    %v384 = vrot.slane %v383, 1
    %v385 = vadd.f32 %v383, %v384
    %v386 = vsel %vm378, %v377, 0.0
    %v387 = vrot.slane %v386, 4
    %v388 = vadd.f32 %v386, %v387
    %v389 = vrot.slane %v388, 2
    %v390 = vadd.f32 %v388, %v389
    %v391 = vrot.slane %v390, 1
    %v392 = vadd.f32 %v390, %v391
    %v393 = vrcp.pop %v385
    %v394 = vrcp.pop %v392
    %v395 = vmul.f32 %v375, %v393
    %v396 = vmul.f32 %v377, %v394
    %v398 = vsel %vm254, %v395, 0
    %400 = vmatpush.xpose.msra.mxu0 0.0
    %401 = vmatpush.xpose.msra.mxu0 0.0
    %402 = vmatpush.xpose.msra.mxu0 0.0
    %403 = vmatpush.xpose.msra.mxu0 0.0
    %404 = vmatpush.xpose.msra.mxu0 0.0
    %405 = vmatpush.xpose.msra.mxu0 0.0
    %406 = vmatpush.xpose.msra.mxu0 0.0
    %407 = vmatpush.xpose.msra.mxu0 0.0
    %408 = vmatpush.xpose.msra.mxu0 0.0
    %409 = vmatpush.xpose.msra.mxu0 0.0
    %410 = vmatpush.xpose.msra.mxu0 0.0
    %411 = vmatpush.xpose.msra.mxu0 0.0
    %412 = vmatpush.xpose.msra.mxu0 0.0
    %413 = vmatpush.xpose.msra.mxu0 0.0
    %414 = vmatpush.xpose.msra.mxu0 %v262
    %415 = vmatpush.xpose.msra.mxu0 %v259
    %416 = vmatmul.f32.gmra.mxu0 %v398
    %v417 = vpop.f32.mrf.mxu0
    %v418 = vadd.f32 0.0, %v417
    %419 = vdwg.mxu0
    %v421 = vsel %vm254, %v396, 0
    %423 = vmatpush.xpose.msra.mxu0 0.0
    %424 = vmatpush.xpose.msra.mxu0 0.0
    %425 = vmatpush.xpose.msra.mxu0 0.0
    %426 = vmatpush.xpose.msra.mxu0 0.0
    %427 = vmatpush.xpose.msra.mxu0 0.0
    %428 = vmatpush.xpose.msra.mxu0 0.0
    %429 = vmatpush.xpose.msra.mxu0 0.0
    %430 = vmatpush.xpose.msra.mxu0 0.0
    %431 = vmatpush.xpose.msra.mxu0 0.0
    %432 = vmatpush.xpose.msra.mxu0 0.0
    %433 = vmatpush.xpose.msra.mxu0 0.0
    %434 = vmatpush.xpose.msra.mxu0 0.0
    %435 = vmatpush.xpose.msra.mxu0 0.0
    %436 = vmatpush.xpose.msra.mxu0 0.0
    %437 = vmatpush.xpose.msra.mxu0 %v262
    %438 = vmatpush.xpose.msra.mxu0 %v259
    %439 = vmatmul.f32.gmra.mxu0 %v421
    %v440 = vpop.f32.mrf.mxu0
    %v441 = vadd.f32 0.0, %v440
    %442 = vdwg.mxu0
    %v443 = vmul.f32 %v237, %v418
    %v444 = vmul.f32 %v244, %v441
    %v445 = vmul.f32 %v443, %v443
    %v446 = vmul.f32 %v444, %v444
    %v447 = vsel %vm230, %v445, 0.0
    %448 = vadd.xlane.f32.xlu0 %v447
    %v449 = vpop.xlane.xlu0 %448
    %v450 = vsel %vm230, %v446, 0.0
    %451 = vadd.xlane.f32.xlu0 %v450
    %v452 = vpop.xlane.xlu0 %451
    %v453 = vadd.f32 %v449, 1.0
    %v454 = vadd.f32 %v452, 1.0
    %v455 = vrcp.pop %v453
    %v456 = vrcp.pop %v454
    %v457 = vmul.f32 %v449, %v455
    %v458 = vmul.f32 %v452, %v456
    %v459 = vadd.f32 %v449, 1e-12
    %v460 = vadd.f32 %v452, 1e-12
    %v461 = vrsqrt.pop %v459
    %v462 = vmul.f32 %v461, %v459
    %v463 = vmul.f32 %v462, %v461
    %v464 = vmul.f32 0.5, %v463
    %v465 = vsub.f32 1.5, %v464
    %v466 = vmul.f32 %v461, %v465
    %vm467 = vweird.f32 %v459
    %vm468 = vweird.f32 %v461
    %vm469 = vmor %vm467, %vm468
    %v470 = vsel %vm469, %v461, %v466
    %v471 = vrsqrt.pop %v460
    %v472 = vmul.f32 %v471, %v460
    %v473 = vmul.f32 %v472, %v471
    %v474 = vmul.f32 0.5, %v473
    %v475 = vsub.f32 1.5, %v474
    %v476 = vmul.f32 %v471, %v475
    %vm477 = vweird.f32 %v460
    %vm478 = vweird.f32 %v471
    %vm479 = vmor %vm477, %vm478
    %v480 = vsel %vm479, %v471, %v476
    %v481 = vmul.f32 %v457, %v470
    %v482 = vmul.f32 %v458, %v480
    %v483 = vmul.f32 %v481, %v443
    %v484 = vmul.f32 %v482, %v444
    %v485 = vmul.f32 %v237, %v483
    %v486 = vmul.f32 %v244, %v484
    %v488 = vsel %vm103, %v485, 0
    %490 = vmatpush.msra.mxu0 0.0
    %491 = vmatpush.msra.mxu0 0.0
    %492 = vmatpush.msra.mxu0 0.0
    %493 = vmatpush.msra.mxu0 0.0
    %494 = vmatpush.msra.mxu0 0.0
    %495 = vmatpush.msra.mxu0 0.0
    %496 = vmatpush.msra.mxu0 0.0
    %497 = vmatpush.msra.mxu0 0.0
    %498 = vmatpush.msra.mxu0 0.0
    %499 = vmatpush.msra.mxu0 0.0
    %500 = vmatpush.msra.mxu0 0.0
    %501 = vmatpush.msra.mxu0 0.0
    %502 = vmatpush.msra.mxu0 0.0
    %503 = vmatpush.msra.mxu0 0.0
    %504 = vmatpush.msra.mxu0 %v229
    %505 = vmatpush.msra.mxu0 %v228
    %506 = vmatmul.f32.gmra.mxu0 %v488
    %v507 = vpop.f32.mrf.mxu0
    %v508 = vadd.f32 0.0, %v507
    %509 = vdwg.mxu0
    %v511 = vsel %vm103, %v486, 0
    %513 = vmatpush.msra.mxu0 0.0
    %514 = vmatpush.msra.mxu0 0.0
    %515 = vmatpush.msra.mxu0 0.0
    %516 = vmatpush.msra.mxu0 0.0
    %517 = vmatpush.msra.mxu0 0.0
    %518 = vmatpush.msra.mxu0 0.0
    %519 = vmatpush.msra.mxu0 0.0
    %520 = vmatpush.msra.mxu0 0.0
    %521 = vmatpush.msra.mxu0 0.0
    %522 = vmatpush.msra.mxu0 0.0
    %523 = vmatpush.msra.mxu0 0.0
    %524 = vmatpush.msra.mxu0 0.0
    %525 = vmatpush.msra.mxu0 0.0
    %526 = vmatpush.msra.mxu0 0.0
    %527 = vmatpush.msra.mxu0 %v229
    %528 = vmatpush.msra.mxu0 %v228
    %529 = vmatmul.f32.gmra.mxu0 %v511
    %v530 = vpop.f32.mrf.mxu0
    %v531 = vadd.f32 0.0, %v530
    %532 = vdwg.mxu0
    %v533 = vadd.f32 %v349, %v508
    %v534 = vadd.f32 %v372, %v531
    %v535 = vmul.f32 %v533, 1.442695
    %v536 = vpow.pop %v535
    %v537 = vmul.f32 %v534, 1.442695
    %v538 = vpow.pop %v537
    %v539 = vsel %vm378, %v536, 0.0
    %v540 = vrot.slane %v539, 4
    %v541 = vadd.f32 %v539, %v540
    %v542 = vrot.slane %v541, 2
    %v543 = vadd.f32 %v541, %v542
    %v544 = vrot.slane %v543, 1
    %v545 = vadd.f32 %v543, %v544
    %v546 = vsel %vm378, %v538, 0.0
    %v547 = vrot.slane %v546, 4
    %v548 = vadd.f32 %v546, %v547
    %v549 = vrot.slane %v548, 2
    %v550 = vadd.f32 %v548, %v549
    %v551 = vrot.slane %v550, 1
    %v552 = vadd.f32 %v550, %v551
    %v553 = vrcp.pop %v545
    %v554 = vrcp.pop %v552
    %v555 = vmul.f32 %v536, %v553
    %v556 = vmul.f32 %v538, %v554
    %v558 = vsel %vm254, %v555, 0
    %560 = vmatpush.xpose.msra.mxu0 0.0
    %561 = vmatpush.xpose.msra.mxu0 0.0
    %562 = vmatpush.xpose.msra.mxu0 0.0
    %563 = vmatpush.xpose.msra.mxu0 0.0
    %564 = vmatpush.xpose.msra.mxu0 0.0
    %565 = vmatpush.xpose.msra.mxu0 0.0
    %566 = vmatpush.xpose.msra.mxu0 0.0
    %567 = vmatpush.xpose.msra.mxu0 0.0
    %568 = vmatpush.xpose.msra.mxu0 0.0
    %569 = vmatpush.xpose.msra.mxu0 0.0
    %570 = vmatpush.xpose.msra.mxu0 0.0
    %571 = vmatpush.xpose.msra.mxu0 0.0
    %572 = vmatpush.xpose.msra.mxu0 0.0
    %573 = vmatpush.xpose.msra.mxu0 0.0
    %574 = vmatpush.xpose.msra.mxu0 %v262
    %575 = vmatpush.xpose.msra.mxu0 %v259
    %576 = vmatmul.f32.gmra.mxu0 %v558
    %v577 = vpop.f32.mrf.mxu0
    %v578 = vadd.f32 0.0, %v577
    %579 = vdwg.mxu0
    %v581 = vsel %vm254, %v556, 0
    %583 = vmatpush.xpose.msra.mxu0 0.0
    %584 = vmatpush.xpose.msra.mxu0 0.0
    %585 = vmatpush.xpose.msra.mxu0 0.0
    %586 = vmatpush.xpose.msra.mxu0 0.0
    %587 = vmatpush.xpose.msra.mxu0 0.0
    %588 = vmatpush.xpose.msra.mxu0 0.0
    %589 = vmatpush.xpose.msra.mxu0 0.0
    %590 = vmatpush.xpose.msra.mxu0 0.0
    %591 = vmatpush.xpose.msra.mxu0 0.0
    %592 = vmatpush.xpose.msra.mxu0 0.0
    %593 = vmatpush.xpose.msra.mxu0 0.0
    %594 = vmatpush.xpose.msra.mxu0 0.0
    %595 = vmatpush.xpose.msra.mxu0 0.0
    %596 = vmatpush.xpose.msra.mxu0 0.0
    %597 = vmatpush.xpose.msra.mxu0 %v262
    %598 = vmatpush.xpose.msra.mxu0 %v259
    %599 = vmatmul.f32.gmra.mxu0 %v581
    %v600 = vpop.f32.mrf.mxu0
    %v601 = vadd.f32 0.0, %v600
    %602 = vdwg.mxu0
    %v603 = vmul.f32 %v237, %v578
    %v604 = vmul.f32 %v244, %v601
    %v605 = vmul.f32 %v603, %v603
    %v606 = vmul.f32 %v604, %v604
    %v607 = vsel %vm230, %v605, 0.0
    %608 = vadd.xlane.f32.xlu0 %v607
    %v609 = vpop.xlane.xlu0 %608
    %v610 = vsel %vm230, %v606, 0.0
    %611 = vadd.xlane.f32.xlu0 %v610
    %v612 = vpop.xlane.xlu0 %611
    %v613 = vadd.f32 %v609, 1.0
    %v614 = vadd.f32 %v612, 1.0
    %v615 = vrcp.pop %v613
    %v616 = vrcp.pop %v614
    %v617 = vmul.f32 %v609, %v615
    %v618 = vmul.f32 %v612, %v616
    %v619 = vadd.f32 %v609, 1e-12
    %v620 = vadd.f32 %v612, 1e-12
    %v621 = vrsqrt.pop %v619
    %v622 = vmul.f32 %v621, %v619
    %v623 = vmul.f32 %v622, %v621
    %v624 = vmul.f32 0.5, %v623
    %v625 = vsub.f32 1.5, %v624
    %v626 = vmul.f32 %v621, %v625
    %vm627 = vweird.f32 %v619
    %vm628 = vweird.f32 %v621
    %vm629 = vmor %vm627, %vm628
    %v630 = vsel %vm629, %v621, %v626
    %v631 = vrsqrt.pop %v620
    %v632 = vmul.f32 %v631, %v620
    %v633 = vmul.f32 %v632, %v631
    %v634 = vmul.f32 0.5, %v633
    %v635 = vsub.f32 1.5, %v634
    %v636 = vmul.f32 %v631, %v635
    %vm637 = vweird.f32 %v620
    %vm638 = vweird.f32 %v631
    %vm639 = vmor %vm637, %vm638
    %v640 = vsel %vm639, %v631, %v636
    %v641 = vmul.f32 %v617, %v630
    %v642 = vmul.f32 %v618, %v640
    %v643 = vmul.f32 %v641, %v603
    %v644 = vmul.f32 %v642, %v604
    %v645 = vld [vmem:[%s4 + $0x48] sm:$0xff]
    %v646 = vsel %vm33, %v159, 0.0
    %647 = vadd.xlane.f32.xlu0 %v646
    %v648 = vpop.xlane.xlu0 %647
    %v649 = vsel %vm33, %v160, 0.0
    %650 = vadd.xlane.f32.xlu0 %v649
    %v651 = vpop.xlane.xlu0 %650
    %v652 = vsel %vm37, 1.0, 0.0
    %v653 = vrot.slane %v652, 4
    %v654 = vadd.f32 %v652, %v653
    %v655 = vrot.slane %v654, 2
    %v656 = vadd.f32 %v654, %v655
    %v657 = vrot.slane %v656, 1
    %v658 = vadd.f32 %v656, %v657
    %v659 = vrcp.pop %v658
    %v661 = vsel %vm103, %v659, 0
    %v664 = vsel %vm103, %v645, 0
    %666 = vmatpush.xpose.msra.mxu0 0.0
    %667 = vmatpush.xpose.msra.mxu0 0.0
    %668 = vmatpush.xpose.msra.mxu0 0.0
    %669 = vmatpush.xpose.msra.mxu0 0.0
    %670 = vmatpush.xpose.msra.mxu0 0.0
    %671 = vmatpush.xpose.msra.mxu0 0.0
    %672 = vmatpush.xpose.msra.mxu0 0.0
    %673 = vmatpush.xpose.msra.mxu0 0.0
    %674 = vmatpush.xpose.msra.mxu0 0.0
    %675 = vmatpush.xpose.msra.mxu0 0.0
    %676 = vmatpush.xpose.msra.mxu0 0.0
    %677 = vmatpush.xpose.msra.mxu0 0.0
    %678 = vmatpush.xpose.msra.mxu0 0.0
    %679 = vmatpush.xpose.msra.mxu0 0.0
    %680 = vmatpush.xpose.msra.mxu0 0.0
    %681 = vmatpush.xpose.msra.mxu0 %v664
    %682 = vmatmul.f32.gmra.mxu0 %v661
    %v683 = vpop.f32.mrf.mxu0
    %v684 = vadd.f32 0.0, %v683
    %685 = vdwg.mxu0
    %v687 = vperm.slane %v684, 0
    %v688 = vlaneseq
    %v689 = vshrl.u32 %v688, 7
    %691 = vset.pattern.permute.xlu0 %v689
    %692 = vperm.xlu0 %691, %v687
    %v693 = vpop.permute.xlu0 %692
    %v694 = vperm.slane %v684, 1
    %v695 = vlaneseq
    %v696 = vshrl.u32 %v695, 7
    %698 = vset.pattern.permute.xlu0 %v696
    %699 = vperm.xlu0 %698, %v694
    %v700 = vpop.permute.xlu0 %699
    %v701 = vperm.slane %v684, 2
    %v702 = vlaneseq
    %v703 = vshrl.u32 %v702, 7
    %705 = vset.pattern.permute.xlu0 %v703
    %706 = vperm.xlu0 %705, %v701
    %v707 = vpop.permute.xlu0 %706
    %v708 = vperm.slane %v684, 3
    %v709 = vlaneseq
    %v710 = vshrl.u32 %v709, 7
    %712 = vset.pattern.permute.xlu0 %v710
    %713 = vperm.xlu0 %712, %v708
    %v714 = vpop.permute.xlu0 %713
    %v715 = vperm.slane %v684, 4
    %v716 = vlaneseq
    %v717 = vshrl.u32 %v716, 7
    %719 = vset.pattern.permute.xlu0 %v717
    %720 = vperm.xlu0 %719, %v715
    %v721 = vpop.permute.xlu0 %720
    %v727 = vmul.f32 %v648, %v693
    %v728 = vmul.f32 %v648, %v700
    %v729 = vmul.f32 %v648, %v707
    %v730 = vmul.f32 %v648, %v714
    %v731 = vmul.f32 %v648, %v721
    %v732 = vmul.f32 %v651, %v693
    %v733 = vmul.f32 %v651, %v700
    %v734 = vmul.f32 %v651, %v707
    %v735 = vmul.f32 %v651, %v714
    %v736 = vmul.f32 %v651, %v721
    %v737 = vmul.f32 %v727, %v727
    %v738 = vmul.f32 %v728, %v728
    %v739 = vmul.f32 %v729, %v729
    %v740 = vmul.f32 %v730, %v730
    %v741 = vmul.f32 %v731, %v731
    %v742 = vmul.f32 %v732, %v732
    %v743 = vmul.f32 %v733, %v733
    %v744 = vmul.f32 %v734, %v734
    %v745 = vmul.f32 %v735, %v735
    %v746 = vmul.f32 %v736, %v736
    %757 = vset.pattern.permute.xlu0 0
    %758 = vperm.xlu0 %757, %v737
    %v759 = vpop.permute.xlu0 %758
    %760 = vset.pattern.permute.xlu0 0
    %761 = vperm.xlu0 %760, %v738
    %v762 = vpop.permute.xlu0 %761
    %763 = vset.pattern.permute.xlu0 0
    %764 = vperm.xlu0 %763, %v739
    %v765 = vpop.permute.xlu0 %764
    %766 = vset.pattern.permute.xlu0 0
    %767 = vperm.xlu0 %766, %v740
    %v768 = vpop.permute.xlu0 %767
    %769 = vset.pattern.permute.xlu0 0
    %770 = vperm.xlu0 %769, %v741
    %v771 = vpop.permute.xlu0 %770
    %772 = vset.pattern.permute.xlu0 0
    %773 = vperm.xlu0 %772, %v742
    %v774 = vpop.permute.xlu0 %773
    %775 = vset.pattern.permute.xlu0 0
    %776 = vperm.xlu0 %775, %v743
    %v777 = vpop.permute.xlu0 %776
    %778 = vset.pattern.permute.xlu0 0
    %779 = vperm.xlu0 %778, %v744
    %v780 = vpop.permute.xlu0 %779
    %781 = vset.pattern.permute.xlu0 0
    %782 = vperm.xlu0 %781, %v745
    %v783 = vpop.permute.xlu0 %782
    %784 = vset.pattern.permute.xlu0 0
    %785 = vperm.xlu0 %784, %v746
    %v786 = vpop.permute.xlu0 %785
    %v787 = vlaneseq
    %v788 = vand.u32 %v787, 127
    %v789 = vperm.slane %v759, %v788
    %v790 = vperm.slane %v762, %v788
    %v791 = vperm.slane %v765, %v788
    %v792 = vperm.slane %v768, %v788
    %v793 = vperm.slane %v771, %v788
    %v794 = vperm.slane %v774, %v788
    %v795 = vperm.slane %v777, %v788
    %v796 = vperm.slane %v780, %v788
    %v797 = vperm.slane %v783, %v788
    %v798 = vperm.slane %v786, %v788
    %vm799 = vcmask 1041409
    %v800 = vsel %vm799, %v790, %v789
    %vm801 = vcmask 1042434
    %v802 = vsel %vm801, %v791, %v800
    %vm803 = vcmask 1043459
    %v804 = vsel %vm803, %v792, %v802
    %vm805 = vcmask 1044484
    %v806 = vsel %vm805, %v793, %v804
    %v807 = vsel %vm799, %v795, %v794
    %v808 = vsel %vm801, %v796, %v807
    %v809 = vsel %vm803, %v797, %v808
    %v810 = vsel %vm805, %v798, %v809
    %vm813 = vcmask 61440
    %v814 = vsel %vm813, %v806, 0.0
    %815 = vadd.xlane.f32.xlu0 %v814
    %v816 = vpop.xlane.xlu0 %815
    %v817 = vsel %vm813, %v810, 0.0
    %818 = vadd.xlane.f32.xlu0 %v817
    %v819 = vpop.xlane.xlu0 %818
    %v820 = vadd.f32 %v816, 1.0
    %v821 = vadd.f32 %v819, 1.0
    %v822 = vrcp.pop %v820
    %v823 = vrcp.pop %v821
    %v824 = vmul.f32 %v816, %v822
    %v825 = vmul.f32 %v819, %v823
    %v826 = vadd.f32 %v816, 1e-12
    %v827 = vadd.f32 %v819, 1e-12
    %v828 = vrsqrt.pop %v826
    %v829 = vmul.f32 %v828, %v826
    %v830 = vmul.f32 %v829, %v828
    %v831 = vmul.f32 0.5, %v830
    %v832 = vsub.f32 1.5, %v831
    %v833 = vmul.f32 %v828, %v832
    %vm834 = vweird.f32 %v826
    %vm835 = vweird.f32 %v828
    %vm836 = vmor %vm834, %vm835
    %v837 = vsel %vm836, %v828, %v833
    %v838 = vrsqrt.pop %v827
    %v839 = vmul.f32 %v838, %v827
    %v840 = vmul.f32 %v839, %v838
    %v841 = vmul.f32 0.5, %v840
    %v842 = vsub.f32 1.5, %v841
    %v843 = vmul.f32 %v838, %v842
    %vm844 = vweird.f32 %v827
    %vm845 = vweird.f32 %v838
    %vm846 = vmor %vm844, %vm845
    %v847 = vsel %vm846, %v838, %v843
    %v848 = vmul.f32 %v824, %v837
    %v849 = vmul.f32 %v825, %v847
    %860 = vset.pattern.permute.xlu0 0
    %861 = vperm.xlu0 %860, %v727
    %v862 = vpop.permute.xlu0 %861
    %863 = vset.pattern.permute.xlu0 0
    %864 = vperm.xlu0 %863, %v728
    %v865 = vpop.permute.xlu0 %864
    %866 = vset.pattern.permute.xlu0 0
    %867 = vperm.xlu0 %866, %v729
    %v868 = vpop.permute.xlu0 %867
    %869 = vset.pattern.permute.xlu0 0
    %870 = vperm.xlu0 %869, %v730
    %v871 = vpop.permute.xlu0 %870
    %872 = vset.pattern.permute.xlu0 0
    %873 = vperm.xlu0 %872, %v731
    %v874 = vpop.permute.xlu0 %873
    %875 = vset.pattern.permute.xlu0 0
    %876 = vperm.xlu0 %875, %v732
    %v877 = vpop.permute.xlu0 %876
    %878 = vset.pattern.permute.xlu0 0
    %879 = vperm.xlu0 %878, %v733
    %v880 = vpop.permute.xlu0 %879
    %881 = vset.pattern.permute.xlu0 0
    %882 = vperm.xlu0 %881, %v734
    %v883 = vpop.permute.xlu0 %882
    %884 = vset.pattern.permute.xlu0 0
    %885 = vperm.xlu0 %884, %v735
    %v886 = vpop.permute.xlu0 %885
    %887 = vset.pattern.permute.xlu0 0
    %888 = vperm.xlu0 %887, %v736
    %v889 = vpop.permute.xlu0 %888
    %v890 = vperm.slane %v862, %v788
    %v891 = vperm.slane %v865, %v788
    %v892 = vperm.slane %v868, %v788
    %v893 = vperm.slane %v871, %v788
    %v894 = vperm.slane %v874, %v788
    %v895 = vperm.slane %v877, %v788
    %v896 = vperm.slane %v880, %v788
    %v897 = vperm.slane %v883, %v788
    %v898 = vperm.slane %v886, %v788
    %v899 = vperm.slane %v889, %v788
    %v900 = vsel %vm799, %v891, %v890
    %v901 = vsel %vm801, %v892, %v900
    %v902 = vsel %vm803, %v893, %v901
    %v903 = vsel %vm805, %v894, %v902
    %v904 = vsel %vm799, %v896, %v895
    %v905 = vsel %vm801, %v897, %v904
    %v906 = vsel %vm803, %v898, %v905
    %v907 = vsel %vm805, %v899, %v906
    %v910 = vmul.f32 %v848, %v903
    %v911 = vmul.f32 %v849, %v907
    %v914 = vperm.slane %v910, 0
    %v915 = vlaneseq
    %v916 = vshrl.u32 %v915, 7
    %918 = vset.pattern.permute.xlu0 %v916
    %919 = vperm.xlu0 %918, %v914
    %v920 = vpop.permute.xlu0 %919
    %v921 = vperm.slane %v910, 1
    %v922 = vlaneseq
    %v923 = vshrl.u32 %v922, 7
    %925 = vset.pattern.permute.xlu0 %v923
    %926 = vperm.xlu0 %925, %v921
    %v927 = vpop.permute.xlu0 %926
    %v928 = vperm.slane %v910, 2
    %v929 = vlaneseq
    %v930 = vshrl.u32 %v929, 7
    %932 = vset.pattern.permute.xlu0 %v930
    %933 = vperm.xlu0 %932, %v928
    %v934 = vpop.permute.xlu0 %933
    %v935 = vperm.slane %v910, 3
    %v936 = vlaneseq
    %v937 = vshrl.u32 %v936, 7
    %939 = vset.pattern.permute.xlu0 %v937
    %940 = vperm.xlu0 %939, %v935
    %v941 = vpop.permute.xlu0 %940
    %v942 = vperm.slane %v910, 4
    %v943 = vlaneseq
    %v944 = vshrl.u32 %v943, 7
    %946 = vset.pattern.permute.xlu0 %v944
    %947 = vperm.xlu0 %946, %v942
    %v948 = vpop.permute.xlu0 %947
    %v949 = vperm.slane %v911, 0
    %v950 = vlaneseq
    %v951 = vshrl.u32 %v950, 7
    %953 = vset.pattern.permute.xlu0 %v951
    %954 = vperm.xlu0 %953, %v949
    %v955 = vpop.permute.xlu0 %954
    %v956 = vperm.slane %v911, 1
    %v957 = vlaneseq
    %v958 = vshrl.u32 %v957, 7
    %960 = vset.pattern.permute.xlu0 %v958
    %961 = vperm.xlu0 %960, %v956
    %v962 = vpop.permute.xlu0 %961
    %v963 = vperm.slane %v911, 2
    %v964 = vlaneseq
    %v965 = vshrl.u32 %v964, 7
    %967 = vset.pattern.permute.xlu0 %v965
    %968 = vperm.xlu0 %967, %v963
    %v969 = vpop.permute.xlu0 %968
    %v970 = vperm.slane %v911, 3
    %v971 = vlaneseq
    %v972 = vshrl.u32 %v971, 7
    %974 = vset.pattern.permute.xlu0 %v972
    %975 = vperm.xlu0 %974, %v970
    %v976 = vpop.permute.xlu0 %975
    %v977 = vperm.slane %v911, 4
    %v978 = vlaneseq
    %v979 = vshrl.u32 %v978, 7
    %981 = vset.pattern.permute.xlu0 %v979
    %982 = vperm.xlu0 %981, %v977
    %v983 = vpop.permute.xlu0 %982
    %v994 = vmul.f32 %v648, %v920
    %v995 = vmul.f32 %v648, %v927
    %v996 = vmul.f32 %v648, %v934
    %v997 = vmul.f32 %v648, %v941
    %v998 = vmul.f32 %v648, %v948
    %v999 = vmul.f32 %v651, %v955
    %v1000 = vmul.f32 %v651, %v962
    %v1001 = vmul.f32 %v651, %v969
    %v1002 = vmul.f32 %v651, %v976
    %v1003 = vmul.f32 %v651, %v983
    %1009 = vset.pattern.permute.xlu0 0
    %1010 = vperm.xlu0 %1009, %v994
    %v1011 = vpop.permute.xlu0 %1010
    %1012 = vset.pattern.permute.xlu0 0
    %1013 = vperm.xlu0 %1012, %v995
    %v1014 = vpop.permute.xlu0 %1013
    %1015 = vset.pattern.permute.xlu0 0
    %1016 = vperm.xlu0 %1015, %v996
    %v1017 = vpop.permute.xlu0 %1016
    %1018 = vset.pattern.permute.xlu0 0
    %1019 = vperm.xlu0 %1018, %v997
    %v1020 = vpop.permute.xlu0 %1019
    %1021 = vset.pattern.permute.xlu0 0
    %1022 = vperm.xlu0 %1021, %v998
    %v1023 = vpop.permute.xlu0 %1022
    %v1024 = vperm.slane %v1011, %v788
    %v1025 = vperm.slane %v1014, %v788
    %v1026 = vperm.slane %v1017, %v788
    %v1027 = vperm.slane %v1020, %v788
    %v1028 = vperm.slane %v1023, %v788
    %v1029 = vsel %vm799, %v1025, %v1024
    %v1030 = vsel %vm801, %v1026, %v1029
    %v1031 = vsel %vm803, %v1027, %v1030
    %v1032 = vsel %vm805, %v1028, %v1031
    %vm1033 = vcmask 64512
    %v1034 = vsel %vm1033, %v1032, 0
    %1036 = vmatpush.msra.mxu0 0.0
    %1037 = vmatpush.msra.mxu0 0.0
    %1038 = vmatpush.msra.mxu0 0.0
    %1039 = vmatpush.msra.mxu0 0.0
    %1040 = vmatpush.msra.mxu0 0.0
    %1041 = vmatpush.msra.mxu0 0.0
    %1042 = vmatpush.msra.mxu0 0.0
    %1043 = vmatpush.msra.mxu0 0.0
    %1044 = vmatpush.msra.mxu0 0.0
    %1045 = vmatpush.msra.mxu0 0.0
    %1046 = vmatpush.msra.mxu0 0.0
    %1047 = vmatpush.msra.mxu0 0.0
    %1048 = vmatpush.msra.mxu0 0.0
    %1049 = vmatpush.msra.mxu0 0.0
    %1050 = vmatpush.msra.mxu0 0.0
    %1051 = vmatpush.msra.mxu0 %v645
    %1052 = vmatmul.f32.gmra.mxu0 %v1034
    %v1053 = vpop.f32.mrf.mxu0
    %v1054 = vadd.f32 0.0, %v1053
    %1055 = vdwg.mxu0
    %1061 = vset.pattern.permute.xlu0 0
    %1062 = vperm.xlu0 %1061, %v999
    %v1063 = vpop.permute.xlu0 %1062
    %1064 = vset.pattern.permute.xlu0 0
    %1065 = vperm.xlu0 %1064, %v1000
    %v1066 = vpop.permute.xlu0 %1065
    %1067 = vset.pattern.permute.xlu0 0
    %1068 = vperm.xlu0 %1067, %v1001
    %v1069 = vpop.permute.xlu0 %1068
    %1070 = vset.pattern.permute.xlu0 0
    %1071 = vperm.xlu0 %1070, %v1002
    %v1072 = vpop.permute.xlu0 %1071
    %1073 = vset.pattern.permute.xlu0 0
    %1074 = vperm.xlu0 %1073, %v1003
    %v1075 = vpop.permute.xlu0 %1074
    %v1076 = vperm.slane %v1063, %v788
    %v1077 = vperm.slane %v1066, %v788
    %v1078 = vperm.slane %v1069, %v788
    %v1079 = vperm.slane %v1072, %v788
    %v1080 = vperm.slane %v1075, %v788
    %v1081 = vsel %vm799, %v1077, %v1076
    %v1082 = vsel %vm801, %v1078, %v1081
    %v1083 = vsel %vm803, %v1079, %v1082
    %v1084 = vsel %vm805, %v1080, %v1083
    %v1085 = vsel %vm1033, %v1084, 0
    %1087 = vmatpush.msra.mxu0 0.0
    %1088 = vmatpush.msra.mxu0 0.0
    %1089 = vmatpush.msra.mxu0 0.0
    %1090 = vmatpush.msra.mxu0 0.0
    %1091 = vmatpush.msra.mxu0 0.0
    %1092 = vmatpush.msra.mxu0 0.0
    %1093 = vmatpush.msra.mxu0 0.0
    %1094 = vmatpush.msra.mxu0 0.0
    %1095 = vmatpush.msra.mxu0 0.0
    %1096 = vmatpush.msra.mxu0 0.0
    %1097 = vmatpush.msra.mxu0 0.0
    %1098 = vmatpush.msra.mxu0 0.0
    %1099 = vmatpush.msra.mxu0 0.0
    %1100 = vmatpush.msra.mxu0 0.0
    %1101 = vmatpush.msra.mxu0 0.0
    %1102 = vmatpush.msra.mxu0 %v645
    %1103 = vmatmul.f32.gmra.mxu0 %v1085
    %v1104 = vpop.f32.mrf.mxu0
    %v1105 = vadd.f32 0.0, %v1104
    %1106 = vdwg.mxu0
    %v1107 = vmul.f32 %v1054, 1.442695
    %v1108 = vpow.pop %v1107
    %v1109 = vmul.f32 %v1105, 1.442695
    %v1110 = vpow.pop %v1109
    %vm1111 = vcmask 126976
    %v1112 = vsel %vm1111, %v1108, 0.0
    %v1113 = vrot.slane %v1112, 4
    %v1114 = vadd.f32 %v1112, %v1113
    %v1115 = vrot.slane %v1114, 2
    %v1116 = vadd.f32 %v1114, %v1115
    %v1117 = vrot.slane %v1116, 1
    %v1118 = vadd.f32 %v1116, %v1117
    %v1119 = vsel %vm1111, %v1110, 0.0
    %v1120 = vrot.slane %v1119, 4
    %v1121 = vadd.f32 %v1119, %v1120
    %v1122 = vrot.slane %v1121, 2
    %v1123 = vadd.f32 %v1121, %v1122
    %v1124 = vrot.slane %v1123, 1
    %v1125 = vadd.f32 %v1123, %v1124
    %v1126 = vrcp.pop %v1118
    %v1127 = vrcp.pop %v1125
    %v1128 = vmul.f32 %v1108, %v1126
    %v1129 = vmul.f32 %v1110, %v1127
    %v1131 = vsel %vm103, %v1128, 0
    %1133 = vmatpush.xpose.msra.mxu0 0.0
    %1134 = vmatpush.xpose.msra.mxu0 0.0
    %1135 = vmatpush.xpose.msra.mxu0 0.0
    %1136 = vmatpush.xpose.msra.mxu0 0.0
    %1137 = vmatpush.xpose.msra.mxu0 0.0
    %1138 = vmatpush.xpose.msra.mxu0 0.0
    %1139 = vmatpush.xpose.msra.mxu0 0.0
    %1140 = vmatpush.xpose.msra.mxu0 0.0
    %1141 = vmatpush.xpose.msra.mxu0 0.0
    %1142 = vmatpush.xpose.msra.mxu0 0.0
    %1143 = vmatpush.xpose.msra.mxu0 0.0
    %1144 = vmatpush.xpose.msra.mxu0 0.0
    %1145 = vmatpush.xpose.msra.mxu0 0.0
    %1146 = vmatpush.xpose.msra.mxu0 0.0
    %1147 = vmatpush.xpose.msra.mxu0 0.0
    %1148 = vmatpush.xpose.msra.mxu0 %v664
    %1149 = vmatmul.f32.gmra.mxu0 %v1131
    %v1150 = vpop.f32.mrf.mxu0
    %v1151 = vadd.f32 0.0, %v1150
    %1152 = vdwg.mxu0
    %v1154 = vsel %vm103, %v1129, 0
    %1156 = vmatpush.xpose.msra.mxu0 0.0
    %1157 = vmatpush.xpose.msra.mxu0 0.0
    %1158 = vmatpush.xpose.msra.mxu0 0.0
    %1159 = vmatpush.xpose.msra.mxu0 0.0
    %1160 = vmatpush.xpose.msra.mxu0 0.0
    %1161 = vmatpush.xpose.msra.mxu0 0.0
    %1162 = vmatpush.xpose.msra.mxu0 0.0
    %1163 = vmatpush.xpose.msra.mxu0 0.0
    %1164 = vmatpush.xpose.msra.mxu0 0.0
    %1165 = vmatpush.xpose.msra.mxu0 0.0
    %1166 = vmatpush.xpose.msra.mxu0 0.0
    %1167 = vmatpush.xpose.msra.mxu0 0.0
    %1168 = vmatpush.xpose.msra.mxu0 0.0
    %1169 = vmatpush.xpose.msra.mxu0 0.0
    %1170 = vmatpush.xpose.msra.mxu0 0.0
    %1171 = vmatpush.xpose.msra.mxu0 %v664
    %1172 = vmatmul.f32.gmra.mxu0 %v1154
    %v1173 = vpop.f32.mrf.mxu0
    %v1174 = vadd.f32 0.0, %v1173
    %1175 = vdwg.mxu0
    %v1178 = vperm.slane %v1151, 0
    %v1179 = vlaneseq
    %v1180 = vshrl.u32 %v1179, 7
    %1182 = vset.pattern.permute.xlu0 %v1180
    %1183 = vperm.xlu0 %1182, %v1178
    %v1184 = vpop.permute.xlu0 %1183
    %v1185 = vperm.slane %v1151, 1
    %v1186 = vlaneseq
    %v1187 = vshrl.u32 %v1186, 7
    %1189 = vset.pattern.permute.xlu0 %v1187
    %1190 = vperm.xlu0 %1189, %v1185
    %v1191 = vpop.permute.xlu0 %1190
    %v1192 = vperm.slane %v1151, 2
    %v1193 = vlaneseq
    %v1194 = vshrl.u32 %v1193, 7
    %1196 = vset.pattern.permute.xlu0 %v1194
    %1197 = vperm.xlu0 %1196, %v1192
    %v1198 = vpop.permute.xlu0 %1197
    %v1199 = vperm.slane %v1151, 3
    %v1200 = vlaneseq
    %v1201 = vshrl.u32 %v1200, 7
    %1203 = vset.pattern.permute.xlu0 %v1201
    %1204 = vperm.xlu0 %1203, %v1199
    %v1205 = vpop.permute.xlu0 %1204
    %v1206 = vperm.slane %v1151, 4
    %v1207 = vlaneseq
    %v1208 = vshrl.u32 %v1207, 7
    %1210 = vset.pattern.permute.xlu0 %v1208
    %1211 = vperm.xlu0 %1210, %v1206
    %v1212 = vpop.permute.xlu0 %1211
    %v1213 = vperm.slane %v1174, 0
    %v1214 = vlaneseq
    %v1215 = vshrl.u32 %v1214, 7
    %1217 = vset.pattern.permute.xlu0 %v1215
    %1218 = vperm.xlu0 %1217, %v1213
    %v1219 = vpop.permute.xlu0 %1218
    %v1220 = vperm.slane %v1174, 1
    %v1221 = vlaneseq
    %v1222 = vshrl.u32 %v1221, 7
    %1224 = vset.pattern.permute.xlu0 %v1222
    %1225 = vperm.xlu0 %1224, %v1220
    %v1226 = vpop.permute.xlu0 %1225
    %v1227 = vperm.slane %v1174, 2
    %v1228 = vlaneseq
    %v1229 = vshrl.u32 %v1228, 7
    %1231 = vset.pattern.permute.xlu0 %v1229
    %1232 = vperm.xlu0 %1231, %v1227
    %v1233 = vpop.permute.xlu0 %1232
    %v1234 = vperm.slane %v1174, 3
    %v1235 = vlaneseq
    %v1236 = vshrl.u32 %v1235, 7
    %1238 = vset.pattern.permute.xlu0 %v1236
    %1239 = vperm.xlu0 %1238, %v1234
    %v1240 = vpop.permute.xlu0 %1239
    %v1241 = vperm.slane %v1174, 4
    %v1242 = vlaneseq
    %v1243 = vshrl.u32 %v1242, 7
    %1245 = vset.pattern.permute.xlu0 %v1243
    %1246 = vperm.xlu0 %1245, %v1241
    %v1247 = vpop.permute.xlu0 %1246
    %v1258 = vmul.f32 %v648, %v1184
    %v1259 = vmul.f32 %v648, %v1191
    %v1260 = vmul.f32 %v648, %v1198
    %v1261 = vmul.f32 %v648, %v1205
    %v1262 = vmul.f32 %v648, %v1212
    %v1263 = vmul.f32 %v651, %v1219
    %v1264 = vmul.f32 %v651, %v1226
    %v1265 = vmul.f32 %v651, %v1233
    %v1266 = vmul.f32 %v651, %v1240
    %v1267 = vmul.f32 %v651, %v1247
    %v1268 = vmul.f32 %v1258, %v1258
    %v1269 = vmul.f32 %v1259, %v1259
    %v1270 = vmul.f32 %v1260, %v1260
    %v1271 = vmul.f32 %v1261, %v1261
    %v1272 = vmul.f32 %v1262, %v1262
    %v1273 = vmul.f32 %v1263, %v1263
    %v1274 = vmul.f32 %v1264, %v1264
    %v1275 = vmul.f32 %v1265, %v1265
    %v1276 = vmul.f32 %v1266, %v1266
    %v1277 = vmul.f32 %v1267, %v1267
    %1288 = vset.pattern.permute.xlu0 0
    %1289 = vperm.xlu0 %1288, %v1268
    %v1290 = vpop.permute.xlu0 %1289
    %1291 = vset.pattern.permute.xlu0 0
    %1292 = vperm.xlu0 %1291, %v1269
    %v1293 = vpop.permute.xlu0 %1292
    %1294 = vset.pattern.permute.xlu0 0
    %1295 = vperm.xlu0 %1294, %v1270
    %v1296 = vpop.permute.xlu0 %1295
    %1297 = vset.pattern.permute.xlu0 0
    %1298 = vperm.xlu0 %1297, %v1271
    %v1299 = vpop.permute.xlu0 %1298
    %1300 = vset.pattern.permute.xlu0 0
    %1301 = vperm.xlu0 %1300, %v1272
    %v1302 = vpop.permute.xlu0 %1301
    %1303 = vset.pattern.permute.xlu0 0
    %1304 = vperm.xlu0 %1303, %v1273
    %v1305 = vpop.permute.xlu0 %1304
    %1306 = vset.pattern.permute.xlu0 0
    %1307 = vperm.xlu0 %1306, %v1274
    %v1308 = vpop.permute.xlu0 %1307
    %1309 = vset.pattern.permute.xlu0 0
    %1310 = vperm.xlu0 %1309, %v1275
    %v1311 = vpop.permute.xlu0 %1310
    %1312 = vset.pattern.permute.xlu0 0
    %1313 = vperm.xlu0 %1312, %v1276
    %v1314 = vpop.permute.xlu0 %1313
    %1315 = vset.pattern.permute.xlu0 0
    %1316 = vperm.xlu0 %1315, %v1277
    %v1317 = vpop.permute.xlu0 %1316
    %v1318 = vperm.slane %v1290, %v788
    %v1319 = vperm.slane %v1293, %v788
    %v1320 = vperm.slane %v1296, %v788
    %v1321 = vperm.slane %v1299, %v788
    %v1322 = vperm.slane %v1302, %v788
    %v1323 = vperm.slane %v1305, %v788
    %v1324 = vperm.slane %v1308, %v788
    %v1325 = vperm.slane %v1311, %v788
    %v1326 = vperm.slane %v1314, %v788
    %v1327 = vperm.slane %v1317, %v788
    %v1328 = vsel %vm799, %v1319, %v1318
    %v1329 = vsel %vm801, %v1320, %v1328
    %v1330 = vsel %vm803, %v1321, %v1329
    %v1331 = vsel %vm805, %v1322, %v1330
    %v1332 = vsel %vm799, %v1324, %v1323
    %v1333 = vsel %vm801, %v1325, %v1332
    %v1334 = vsel %vm803, %v1326, %v1333
    %v1335 = vsel %vm805, %v1327, %v1334
    %v1338 = vsel %vm813, %v1331, 0.0
    %1339 = vadd.xlane.f32.xlu0 %v1338
    %v1340 = vpop.xlane.xlu0 %1339
    %v1341 = vsel %vm813, %v1335, 0.0
    %1342 = vadd.xlane.f32.xlu0 %v1341
    %v1343 = vpop.xlane.xlu0 %1342
    %v1344 = vadd.f32 %v1340, 1.0
    %v1345 = vadd.f32 %v1343, 1.0
    %v1346 = vrcp.pop %v1344
    %v1347 = vrcp.pop %v1345
    %v1348 = vmul.f32 %v1340, %v1346
    %v1349 = vmul.f32 %v1343, %v1347
    %v1350 = vadd.f32 %v1340, 1e-12
    %v1351 = vadd.f32 %v1343, 1e-12
    %v1352 = vrsqrt.pop %v1350
    %v1353 = vmul.f32 %v1352, %v1350
    %v1354 = vmul.f32 %v1353, %v1352
    %v1355 = vmul.f32 0.5, %v1354
    %v1356 = vsub.f32 1.5, %v1355
    %v1357 = vmul.f32 %v1352, %v1356
    %vm1358 = vweird.f32 %v1350
    %vm1359 = vweird.f32 %v1352
    %vm1360 = vmor %vm1358, %vm1359
    %v1361 = vsel %vm1360, %v1352, %v1357
    %v1362 = vrsqrt.pop %v1351
    %v1363 = vmul.f32 %v1362, %v1351
    %v1364 = vmul.f32 %v1363, %v1362
    %v1365 = vmul.f32 0.5, %v1364
    %v1366 = vsub.f32 1.5, %v1365
    %v1367 = vmul.f32 %v1362, %v1366
    %vm1368 = vweird.f32 %v1351
    %vm1369 = vweird.f32 %v1362
    %vm1370 = vmor %vm1368, %vm1369
    %v1371 = vsel %vm1370, %v1362, %v1367
    %v1372 = vmul.f32 %v1348, %v1361
    %v1373 = vmul.f32 %v1349, %v1371
    %1384 = vset.pattern.permute.xlu0 0
    %1385 = vperm.xlu0 %1384, %v1258
    %v1386 = vpop.permute.xlu0 %1385
    %1387 = vset.pattern.permute.xlu0 0
    %1388 = vperm.xlu0 %1387, %v1259
    %v1389 = vpop.permute.xlu0 %1388
    %1390 = vset.pattern.permute.xlu0 0
    %1391 = vperm.xlu0 %1390, %v1260
    %v1392 = vpop.permute.xlu0 %1391
    %1393 = vset.pattern.permute.xlu0 0
    %1394 = vperm.xlu0 %1393, %v1261
    %v1395 = vpop.permute.xlu0 %1394
    %1396 = vset.pattern.permute.xlu0 0
    %1397 = vperm.xlu0 %1396, %v1262
    %v1398 = vpop.permute.xlu0 %1397
    %1399 = vset.pattern.permute.xlu0 0
    %1400 = vperm.xlu0 %1399, %v1263
    %v1401 = vpop.permute.xlu0 %1400
    %1402 = vset.pattern.permute.xlu0 0
    %1403 = vperm.xlu0 %1402, %v1264
    %v1404 = vpop.permute.xlu0 %1403
    %1405 = vset.pattern.permute.xlu0 0
    %1406 = vperm.xlu0 %1405, %v1265
    %v1407 = vpop.permute.xlu0 %1406
    %1408 = vset.pattern.permute.xlu0 0
    %1409 = vperm.xlu0 %1408, %v1266
    %v1410 = vpop.permute.xlu0 %1409
    %1411 = vset.pattern.permute.xlu0 0
    %1412 = vperm.xlu0 %1411, %v1267
    %v1413 = vpop.permute.xlu0 %1412
    %v1414 = vperm.slane %v1386, %v788
    %v1415 = vperm.slane %v1389, %v788
    %v1416 = vperm.slane %v1392, %v788
    %v1417 = vperm.slane %v1395, %v788
    %v1418 = vperm.slane %v1398, %v788
    %v1419 = vperm.slane %v1401, %v788
    %v1420 = vperm.slane %v1404, %v788
    %v1421 = vperm.slane %v1407, %v788
    %v1422 = vperm.slane %v1410, %v788
    %v1423 = vperm.slane %v1413, %v788
    %v1424 = vsel %vm799, %v1415, %v1414
    %v1425 = vsel %vm801, %v1416, %v1424
    %v1426 = vsel %vm803, %v1417, %v1425
    %v1427 = vsel %vm805, %v1418, %v1426
    %v1428 = vsel %vm799, %v1420, %v1419
    %v1429 = vsel %vm801, %v1421, %v1428
    %v1430 = vsel %vm803, %v1422, %v1429
    %v1431 = vsel %vm805, %v1423, %v1430
    %v1434 = vmul.f32 %v1372, %v1427
    %v1435 = vmul.f32 %v1373, %v1431
    %v1438 = vperm.slane %v1434, 0
    %v1439 = vlaneseq
    %v1440 = vshrl.u32 %v1439, 7
    %1442 = vset.pattern.permute.xlu0 %v1440
    %1443 = vperm.xlu0 %1442, %v1438
    %v1444 = vpop.permute.xlu0 %1443
    %v1445 = vperm.slane %v1434, 1
    %v1446 = vlaneseq
    %v1447 = vshrl.u32 %v1446, 7
    %1449 = vset.pattern.permute.xlu0 %v1447
    %1450 = vperm.xlu0 %1449, %v1445
    %v1451 = vpop.permute.xlu0 %1450
    %v1452 = vperm.slane %v1434, 2
    %v1453 = vlaneseq
    %v1454 = vshrl.u32 %v1453, 7
    %1456 = vset.pattern.permute.xlu0 %v1454
    %1457 = vperm.xlu0 %1456, %v1452
    %v1458 = vpop.permute.xlu0 %1457
    %v1459 = vperm.slane %v1434, 3
    %v1460 = vlaneseq
    %v1461 = vshrl.u32 %v1460, 7
    %1463 = vset.pattern.permute.xlu0 %v1461
    %1464 = vperm.xlu0 %1463, %v1459
    %v1465 = vpop.permute.xlu0 %1464
    %v1466 = vperm.slane %v1434, 4
    %v1467 = vlaneseq
    %v1468 = vshrl.u32 %v1467, 7
    %1470 = vset.pattern.permute.xlu0 %v1468
    %1471 = vperm.xlu0 %1470, %v1466
    %v1472 = vpop.permute.xlu0 %1471
    %v1473 = vperm.slane %v1435, 0
    %v1474 = vlaneseq
    %v1475 = vshrl.u32 %v1474, 7
    %1477 = vset.pattern.permute.xlu0 %v1475
    %1478 = vperm.xlu0 %1477, %v1473
    %v1479 = vpop.permute.xlu0 %1478
    %v1480 = vperm.slane %v1435, 1
    %v1481 = vlaneseq
    %v1482 = vshrl.u32 %v1481, 7
    %1484 = vset.pattern.permute.xlu0 %v1482
    %1485 = vperm.xlu0 %1484, %v1480
    %v1486 = vpop.permute.xlu0 %1485
    %v1487 = vperm.slane %v1435, 2
    %v1488 = vlaneseq
    %v1489 = vshrl.u32 %v1488, 7
    %1491 = vset.pattern.permute.xlu0 %v1489
    %1492 = vperm.xlu0 %1491, %v1487
    %v1493 = vpop.permute.xlu0 %1492
    %v1494 = vperm.slane %v1435, 3
    %v1495 = vlaneseq
    %v1496 = vshrl.u32 %v1495, 7
    %1498 = vset.pattern.permute.xlu0 %v1496
    %1499 = vperm.xlu0 %1498, %v1494
    %v1500 = vpop.permute.xlu0 %1499
    %v1501 = vperm.slane %v1435, 4
    %v1502 = vlaneseq
    %v1503 = vshrl.u32 %v1502, 7
    %1505 = vset.pattern.permute.xlu0 %v1503
    %1506 = vperm.xlu0 %1505, %v1501
    %v1507 = vpop.permute.xlu0 %1506
    %v1518 = vmul.f32 %v648, %v1444
    %v1519 = vmul.f32 %v648, %v1451
    %v1520 = vmul.f32 %v648, %v1458
    %v1521 = vmul.f32 %v648, %v1465
    %v1522 = vmul.f32 %v648, %v1472
    %v1523 = vmul.f32 %v651, %v1479
    %v1524 = vmul.f32 %v651, %v1486
    %v1525 = vmul.f32 %v651, %v1493
    %v1526 = vmul.f32 %v651, %v1500
    %v1527 = vmul.f32 %v651, %v1507
    %1533 = vset.pattern.permute.xlu0 0
    %1534 = vperm.xlu0 %1533, %v1518
    %v1535 = vpop.permute.xlu0 %1534
    %1536 = vset.pattern.permute.xlu0 0
    %1537 = vperm.xlu0 %1536, %v1519
    %v1538 = vpop.permute.xlu0 %1537
    %1539 = vset.pattern.permute.xlu0 0
    %1540 = vperm.xlu0 %1539, %v1520
    %v1541 = vpop.permute.xlu0 %1540
    %1542 = vset.pattern.permute.xlu0 0
    %1543 = vperm.xlu0 %1542, %v1521
    %v1544 = vpop.permute.xlu0 %1543
    %1545 = vset.pattern.permute.xlu0 0
    %1546 = vperm.xlu0 %1545, %v1522
    %v1547 = vpop.permute.xlu0 %1546
    %v1548 = vperm.slane %v1535, %v788
    %v1549 = vperm.slane %v1538, %v788
    %v1550 = vperm.slane %v1541, %v788
    %v1551 = vperm.slane %v1544, %v788
    %v1552 = vperm.slane %v1547, %v788
    %v1553 = vsel %vm799, %v1549, %v1548
    %v1554 = vsel %vm801, %v1550, %v1553
    %v1555 = vsel %vm803, %v1551, %v1554
    %v1556 = vsel %vm805, %v1552, %v1555
    %v1557 = vsel %vm1033, %v1556, 0
    %1559 = vmatpush.msra.mxu0 0.0
    %1560 = vmatpush.msra.mxu0 0.0
    %1561 = vmatpush.msra.mxu0 0.0
    %1562 = vmatpush.msra.mxu0 0.0
    %1563 = vmatpush.msra.mxu0 0.0
    %1564 = vmatpush.msra.mxu0 0.0
    %1565 = vmatpush.msra.mxu0 0.0
    %1566 = vmatpush.msra.mxu0 0.0
    %1567 = vmatpush.msra.mxu0 0.0
    %1568 = vmatpush.msra.mxu0 0.0
    %1569 = vmatpush.msra.mxu0 0.0
    %1570 = vmatpush.msra.mxu0 0.0
    %1571 = vmatpush.msra.mxu0 0.0
    %1572 = vmatpush.msra.mxu0 0.0
    %1573 = vmatpush.msra.mxu0 0.0
    %1574 = vmatpush.msra.mxu0 %v645
    %1575 = vmatmul.f32.gmra.mxu0 %v1557
    %v1576 = vpop.f32.mrf.mxu0
    %v1577 = vadd.f32 0.0, %v1576
    %1578 = vdwg.mxu0
    %1584 = vset.pattern.permute.xlu0 0
    %1585 = vperm.xlu0 %1584, %v1523
    %v1586 = vpop.permute.xlu0 %1585
    %1587 = vset.pattern.permute.xlu0 0
    %1588 = vperm.xlu0 %1587, %v1524
    %v1589 = vpop.permute.xlu0 %1588
    %1590 = vset.pattern.permute.xlu0 0
    %1591 = vperm.xlu0 %1590, %v1525
    %v1592 = vpop.permute.xlu0 %1591
    %1593 = vset.pattern.permute.xlu0 0
    %1594 = vperm.xlu0 %1593, %v1526
    %v1595 = vpop.permute.xlu0 %1594
    %1596 = vset.pattern.permute.xlu0 0
    %1597 = vperm.xlu0 %1596, %v1527
    %v1598 = vpop.permute.xlu0 %1597
    %v1599 = vperm.slane %v1586, %v788
    %v1600 = vperm.slane %v1589, %v788
    %v1601 = vperm.slane %v1592, %v788
    %v1602 = vperm.slane %v1595, %v788
    %v1603 = vperm.slane %v1598, %v788
    %v1604 = vsel %vm799, %v1600, %v1599
    %v1605 = vsel %vm801, %v1601, %v1604
    %v1606 = vsel %vm803, %v1602, %v1605
    %v1607 = vsel %vm805, %v1603, %v1606
    %v1608 = vsel %vm1033, %v1607, 0
    %1610 = vmatpush.msra.mxu0 0.0
    %1611 = vmatpush.msra.mxu0 0.0
    %1612 = vmatpush.msra.mxu0 0.0
    %1613 = vmatpush.msra.mxu0 0.0
    %1614 = vmatpush.msra.mxu0 0.0
    %1615 = vmatpush.msra.mxu0 0.0
    %1616 = vmatpush.msra.mxu0 0.0
    %1617 = vmatpush.msra.mxu0 0.0
    %1618 = vmatpush.msra.mxu0 0.0
    %1619 = vmatpush.msra.mxu0 0.0
    %1620 = vmatpush.msra.mxu0 0.0
    %1621 = vmatpush.msra.mxu0 0.0
    %1622 = vmatpush.msra.mxu0 0.0
    %1623 = vmatpush.msra.mxu0 0.0
    %1624 = vmatpush.msra.mxu0 0.0
    %1625 = vmatpush.msra.mxu0 %v645
    %1626 = vmatmul.f32.gmra.mxu0 %v1608
    %v1627 = vpop.f32.mrf.mxu0
    %v1628 = vadd.f32 0.0, %v1627
    %1629 = vdwg.mxu0
    %v1630 = vadd.f32 %v1054, %v1577
    %v1631 = vadd.f32 %v1105, %v1628
    %v1632 = vmul.f32 %v1630, 1.442695
    %v1633 = vpow.pop %v1632
    %v1634 = vmul.f32 %v1631, 1.442695
    %v1635 = vpow.pop %v1634
    %v1636 = vsel %vm1111, %v1633, 0.0
    %v1637 = vrot.slane %v1636, 4
    %v1638 = vadd.f32 %v1636, %v1637
    %v1639 = vrot.slane %v1638, 2
    %v1640 = vadd.f32 %v1638, %v1639
    %v1641 = vrot.slane %v1640, 1
    %v1642 = vadd.f32 %v1640, %v1641
    %v1643 = vsel %vm1111, %v1635, 0.0
    %v1644 = vrot.slane %v1643, 4
    %v1645 = vadd.f32 %v1643, %v1644
    %v1646 = vrot.slane %v1645, 2
    %v1647 = vadd.f32 %v1645, %v1646
    %v1648 = vrot.slane %v1647, 1
    %v1649 = vadd.f32 %v1647, %v1648
    %v1650 = vrcp.pop %v1642
    %v1651 = vrcp.pop %v1649
    %v1652 = vmul.f32 %v1633, %v1650
    %v1653 = vmul.f32 %v1635, %v1651
    %v1655 = vsel %vm103, %v1652, 0
    %1657 = vmatpush.xpose.msra.mxu0 0.0
    %1658 = vmatpush.xpose.msra.mxu0 0.0
    %1659 = vmatpush.xpose.msra.mxu0 0.0
    %1660 = vmatpush.xpose.msra.mxu0 0.0
    %1661 = vmatpush.xpose.msra.mxu0 0.0
    %1662 = vmatpush.xpose.msra.mxu0 0.0
    %1663 = vmatpush.xpose.msra.mxu0 0.0
    %1664 = vmatpush.xpose.msra.mxu0 0.0
    %1665 = vmatpush.xpose.msra.mxu0 0.0
    %1666 = vmatpush.xpose.msra.mxu0 0.0
    %1667 = vmatpush.xpose.msra.mxu0 0.0
    %1668 = vmatpush.xpose.msra.mxu0 0.0
    %1669 = vmatpush.xpose.msra.mxu0 0.0
    %1670 = vmatpush.xpose.msra.mxu0 0.0
    %1671 = vmatpush.xpose.msra.mxu0 0.0
    %1672 = vmatpush.xpose.msra.mxu0 %v664
    %1673 = vmatmul.f32.gmra.mxu0 %v1655
    %v1674 = vpop.f32.mrf.mxu0
    %v1675 = vadd.f32 0.0, %v1674
    %1676 = vdwg.mxu0
    %v1678 = vsel %vm103, %v1653, 0
    %1680 = vmatpush.xpose.msra.mxu0 0.0
    %1681 = vmatpush.xpose.msra.mxu0 0.0
    %1682 = vmatpush.xpose.msra.mxu0 0.0
    %1683 = vmatpush.xpose.msra.mxu0 0.0
    %1684 = vmatpush.xpose.msra.mxu0 0.0
    %1685 = vmatpush.xpose.msra.mxu0 0.0
    %1686 = vmatpush.xpose.msra.mxu0 0.0
    %1687 = vmatpush.xpose.msra.mxu0 0.0
    %1688 = vmatpush.xpose.msra.mxu0 0.0
    %1689 = vmatpush.xpose.msra.mxu0 0.0
    %1690 = vmatpush.xpose.msra.mxu0 0.0
    %1691 = vmatpush.xpose.msra.mxu0 0.0
    %1692 = vmatpush.xpose.msra.mxu0 0.0
    %1693 = vmatpush.xpose.msra.mxu0 0.0
    %1694 = vmatpush.xpose.msra.mxu0 0.0
    %1695 = vmatpush.xpose.msra.mxu0 %v664
    %1696 = vmatmul.f32.gmra.mxu0 %v1678
    %v1697 = vpop.f32.mrf.mxu0
    %v1698 = vadd.f32 0.0, %v1697
    %1699 = vdwg.mxu0
    %v1702 = vperm.slane %v1675, 0
    %v1703 = vlaneseq
    %v1704 = vshrl.u32 %v1703, 7
    %1706 = vset.pattern.permute.xlu0 %v1704
    %1707 = vperm.xlu0 %1706, %v1702
    %v1708 = vpop.permute.xlu0 %1707
    %v1709 = vperm.slane %v1675, 1
    %v1710 = vlaneseq
    %v1711 = vshrl.u32 %v1710, 7
    %1713 = vset.pattern.permute.xlu0 %v1711
    %1714 = vperm.xlu0 %1713, %v1709
    %v1715 = vpop.permute.xlu0 %1714
    %v1716 = vperm.slane %v1675, 2
    %v1717 = vlaneseq
    %v1718 = vshrl.u32 %v1717, 7
    %1720 = vset.pattern.permute.xlu0 %v1718
    %1721 = vperm.xlu0 %1720, %v1716
    %v1722 = vpop.permute.xlu0 %1721
    %v1723 = vperm.slane %v1675, 3
    %v1724 = vlaneseq
    %v1725 = vshrl.u32 %v1724, 7
    %1727 = vset.pattern.permute.xlu0 %v1725
    %1728 = vperm.xlu0 %1727, %v1723
    %v1729 = vpop.permute.xlu0 %1728
    %v1730 = vperm.slane %v1675, 4
    %v1731 = vlaneseq
    %v1732 = vshrl.u32 %v1731, 7
    %1734 = vset.pattern.permute.xlu0 %v1732
    %1735 = vperm.xlu0 %1734, %v1730
    %v1736 = vpop.permute.xlu0 %1735
    %v1737 = vperm.slane %v1698, 0
    %v1738 = vlaneseq
    %v1739 = vshrl.u32 %v1738, 7
    %1741 = vset.pattern.permute.xlu0 %v1739
    %1742 = vperm.xlu0 %1741, %v1737
    %v1743 = vpop.permute.xlu0 %1742
    %v1744 = vperm.slane %v1698, 1
    %v1745 = vlaneseq
    %v1746 = vshrl.u32 %v1745, 7
    %1748 = vset.pattern.permute.xlu0 %v1746
    %1749 = vperm.xlu0 %1748, %v1744
    %v1750 = vpop.permute.xlu0 %1749
    %v1751 = vperm.slane %v1698, 2
    %v1752 = vlaneseq
    %v1753 = vshrl.u32 %v1752, 7
    %1755 = vset.pattern.permute.xlu0 %v1753
    %1756 = vperm.xlu0 %1755, %v1751
    %v1757 = vpop.permute.xlu0 %1756
    %v1758 = vperm.slane %v1698, 3
    %v1759 = vlaneseq
    %v1760 = vshrl.u32 %v1759, 7
    %1762 = vset.pattern.permute.xlu0 %v1760
    %1763 = vperm.xlu0 %1762, %v1758
    %v1764 = vpop.permute.xlu0 %1763
    %v1765 = vperm.slane %v1698, 4
    %v1766 = vlaneseq
    %v1767 = vshrl.u32 %v1766, 7
    %1769 = vset.pattern.permute.xlu0 %v1767
    %1770 = vperm.xlu0 %1769, %v1765
    %v1771 = vpop.permute.xlu0 %1770
    %v1782 = vmul.f32 %v648, %v1708
    %v1783 = vmul.f32 %v648, %v1715
    %v1784 = vmul.f32 %v648, %v1722
    %v1785 = vmul.f32 %v648, %v1729
    %v1786 = vmul.f32 %v648, %v1736
    %v1787 = vmul.f32 %v651, %v1743
    %v1788 = vmul.f32 %v651, %v1750
    %v1789 = vmul.f32 %v651, %v1757
    %v1790 = vmul.f32 %v651, %v1764
    %v1791 = vmul.f32 %v651, %v1771
    %v1792 = vmul.f32 %v1782, %v1782
    %v1793 = vmul.f32 %v1783, %v1783
    %v1794 = vmul.f32 %v1784, %v1784
    %v1795 = vmul.f32 %v1785, %v1785
    %v1796 = vmul.f32 %v1786, %v1786
    %v1797 = vmul.f32 %v1787, %v1787
    %v1798 = vmul.f32 %v1788, %v1788
    %v1799 = vmul.f32 %v1789, %v1789
    %v1800 = vmul.f32 %v1790, %v1790
    %v1801 = vmul.f32 %v1791, %v1791
    %1812 = vset.pattern.permute.xlu0 0
    %1813 = vperm.xlu0 %1812, %v1792
    %v1814 = vpop.permute.xlu0 %1813
    %1815 = vset.pattern.permute.xlu0 0
    %1816 = vperm.xlu0 %1815, %v1793
    %v1817 = vpop.permute.xlu0 %1816
    %1818 = vset.pattern.permute.xlu0 0
    %1819 = vperm.xlu0 %1818, %v1794
    %v1820 = vpop.permute.xlu0 %1819
    %1821 = vset.pattern.permute.xlu0 0
    %1822 = vperm.xlu0 %1821, %v1795
    %v1823 = vpop.permute.xlu0 %1822
    %1824 = vset.pattern.permute.xlu0 0
    %1825 = vperm.xlu0 %1824, %v1796
    %v1826 = vpop.permute.xlu0 %1825
    %1827 = vset.pattern.permute.xlu0 0
    %1828 = vperm.xlu0 %1827, %v1797
    %v1829 = vpop.permute.xlu0 %1828
    %1830 = vset.pattern.permute.xlu0 0
    %1831 = vperm.xlu0 %1830, %v1798
    %v1832 = vpop.permute.xlu0 %1831
    %1833 = vset.pattern.permute.xlu0 0
    %1834 = vperm.xlu0 %1833, %v1799
    %v1835 = vpop.permute.xlu0 %1834
    %1836 = vset.pattern.permute.xlu0 0
    %1837 = vperm.xlu0 %1836, %v1800
    %v1838 = vpop.permute.xlu0 %1837
    %1839 = vset.pattern.permute.xlu0 0
    %1840 = vperm.xlu0 %1839, %v1801
    %v1841 = vpop.permute.xlu0 %1840
    %v1842 = vperm.slane %v1814, %v788
    %v1843 = vperm.slane %v1817, %v788
    %v1844 = vperm.slane %v1820, %v788
    %v1845 = vperm.slane %v1823, %v788
    %v1846 = vperm.slane %v1826, %v788
    %v1847 = vperm.slane %v1829, %v788
    %v1848 = vperm.slane %v1832, %v788
    %v1849 = vperm.slane %v1835, %v788
    %v1850 = vperm.slane %v1838, %v788
    %v1851 = vperm.slane %v1841, %v788
    %v1852 = vsel %vm799, %v1843, %v1842
    %v1853 = vsel %vm801, %v1844, %v1852
    %v1854 = vsel %vm803, %v1845, %v1853
    %v1855 = vsel %vm805, %v1846, %v1854
    %v1856 = vsel %vm799, %v1848, %v1847
    %v1857 = vsel %vm801, %v1849, %v1856
    %v1858 = vsel %vm803, %v1850, %v1857
    %v1859 = vsel %vm805, %v1851, %v1858
    %v1862 = vsel %vm813, %v1855, 0.0
    %1863 = vadd.xlane.f32.xlu0 %v1862
    %v1864 = vpop.xlane.xlu0 %1863
    %v1865 = vsel %vm813, %v1859, 0.0
    %1866 = vadd.xlane.f32.xlu0 %v1865
    %v1867 = vpop.xlane.xlu0 %1866
    %v1868 = vadd.f32 %v1864, 1.0
    %v1869 = vadd.f32 %v1867, 1.0
    %v1870 = vrcp.pop %v1868
    %v1871 = vrcp.pop %v1869
    %v1872 = vmul.f32 %v1864, %v1870
    %v1873 = vmul.f32 %v1867, %v1871
    %v1874 = vadd.f32 %v1864, 1e-12
    %v1875 = vadd.f32 %v1867, 1e-12
    %v1876 = vrsqrt.pop %v1874
    %v1877 = vmul.f32 %v1876, %v1874
    %v1878 = vmul.f32 %v1877, %v1876
    %v1879 = vmul.f32 0.5, %v1878
    %v1880 = vsub.f32 1.5, %v1879
    %v1881 = vmul.f32 %v1876, %v1880
    %vm1882 = vweird.f32 %v1874
    %vm1883 = vweird.f32 %v1876
    %vm1884 = vmor %vm1882, %vm1883
    %v1885 = vsel %vm1884, %v1876, %v1881
    %v1886 = vrsqrt.pop %v1875
    %v1887 = vmul.f32 %v1886, %v1875
    %v1888 = vmul.f32 %v1887, %v1886
    %v1889 = vmul.f32 0.5, %v1888
    %v1890 = vsub.f32 1.5, %v1889
    %v1891 = vmul.f32 %v1886, %v1890
    %vm1892 = vweird.f32 %v1875
    %vm1893 = vweird.f32 %v1886
    %vm1894 = vmor %vm1892, %vm1893
    %v1895 = vsel %vm1894, %v1886, %v1891
    %v1896 = vmul.f32 %v1872, %v1885
    %v1897 = vmul.f32 %v1873, %v1895
    %1908 = vset.pattern.permute.xlu0 0
    %1909 = vperm.xlu0 %1908, %v1782
    %v1910 = vpop.permute.xlu0 %1909
    %1911 = vset.pattern.permute.xlu0 0
    %1912 = vperm.xlu0 %1911, %v1783
    %v1913 = vpop.permute.xlu0 %1912
    %1914 = vset.pattern.permute.xlu0 0
    %1915 = vperm.xlu0 %1914, %v1784
    %v1916 = vpop.permute.xlu0 %1915
    %1917 = vset.pattern.permute.xlu0 0
    %1918 = vperm.xlu0 %1917, %v1785
    %v1919 = vpop.permute.xlu0 %1918
    %1920 = vset.pattern.permute.xlu0 0
    %1921 = vperm.xlu0 %1920, %v1786
    %v1922 = vpop.permute.xlu0 %1921
    %1923 = vset.pattern.permute.xlu0 0
    %1924 = vperm.xlu0 %1923, %v1787
    %v1925 = vpop.permute.xlu0 %1924
    %1926 = vset.pattern.permute.xlu0 0
    %1927 = vperm.xlu0 %1926, %v1788
    %v1928 = vpop.permute.xlu0 %1927
    %1929 = vset.pattern.permute.xlu0 0
    %1930 = vperm.xlu0 %1929, %v1789
    %v1931 = vpop.permute.xlu0 %1930
    %1932 = vset.pattern.permute.xlu0 0
    %1933 = vperm.xlu0 %1932, %v1790
    %v1934 = vpop.permute.xlu0 %1933
    %1935 = vset.pattern.permute.xlu0 0
    %1936 = vperm.xlu0 %1935, %v1791
    %v1937 = vpop.permute.xlu0 %1936
    %v1938 = vperm.slane %v1910, %v788
    %v1939 = vperm.slane %v1913, %v788
    %v1940 = vperm.slane %v1916, %v788
    %v1941 = vperm.slane %v1919, %v788
    %v1942 = vperm.slane %v1922, %v788
    %v1943 = vperm.slane %v1925, %v788
    %v1944 = vperm.slane %v1928, %v788
    %v1945 = vperm.slane %v1931, %v788
    %v1946 = vperm.slane %v1934, %v788
    %v1947 = vperm.slane %v1937, %v788
    %v1948 = vsel %vm799, %v1939, %v1938
    %v1949 = vsel %vm801, %v1940, %v1948
    %v1950 = vsel %vm803, %v1941, %v1949
    %v1951 = vsel %vm805, %v1942, %v1950
    %v1952 = vsel %vm799, %v1944, %v1943
    %v1953 = vsel %vm801, %v1945, %v1952
    %v1954 = vsel %vm803, %v1946, %v1953
    %v1955 = vsel %vm805, %v1947, %v1954
    %v1958 = vmul.f32 %v1896, %v1951
    %v1959 = vmul.f32 %v1897, %v1955
    %v1960 = vld [vmem:[%s4 + $0x60] sm:$0xff]
    %v1961 = vld [vmem:[%s4 + $0x68] sm:$0xff]
    %v1962 = vld [vmem:[%s4 + $0x70] sm:$0xff]
    %v1963 = vld [vmem:[%s4 + $0x78] sm:$0xff]
    %v1966 = vrot.slane %v643, 1
    %v1967 = vsel %vm799, %v644, %v1966
    %v1968 = vsel %vm103, %v1967, 0
    %1970 = vmatpush.msra.mxu0 0.0
    %1971 = vmatpush.msra.mxu0 0.0
    %1972 = vmatpush.msra.mxu0 0.0
    %1973 = vmatpush.msra.mxu0 0.0
    %1974 = vmatpush.msra.mxu0 0.0
    %1975 = vmatpush.msra.mxu0 0.0
    %1976 = vmatpush.msra.mxu0 0.0
    %1977 = vmatpush.msra.mxu0 0.0
    %1978 = vmatpush.msra.mxu0 0.0
    %1979 = vmatpush.msra.mxu0 0.0
    %1980 = vmatpush.msra.mxu0 0.0
    %1981 = vmatpush.msra.mxu0 0.0
    %1982 = vmatpush.msra.mxu0 0.0
    %1983 = vmatpush.msra.mxu0 0.0
    %1984 = vmatpush.msra.mxu0 %v1963
    %1985 = vmatpush.msra.mxu0 %v1962
    %1986 = vmatmul.f32.gmra.mxu0 %v1968
    %v1987 = vpop.f32.mrf.mxu0
    %v1988 = vadd.f32 0.0, %v1987
    %1989 = vdwg.mxu0
    %v1990 = vrot.slane %v644, 7
    %v1991 = vsel %vm799, %v1990, %v643
    %v1992 = vsel %vm103, %v1991, 0
    %1994 = vmatpush.msra.mxu0 0.0
    %1995 = vmatpush.msra.mxu0 0.0
    %1996 = vmatpush.msra.mxu0 0.0
    %1997 = vmatpush.msra.mxu0 0.0
    %1998 = vmatpush.msra.mxu0 0.0
    %1999 = vmatpush.msra.mxu0 0.0
    %2000 = vmatpush.msra.mxu0 0.0
    %2001 = vmatpush.msra.mxu0 0.0
    %2002 = vmatpush.msra.mxu0 0.0
    %2003 = vmatpush.msra.mxu0 0.0
    %2004 = vmatpush.msra.mxu0 0.0
    %2005 = vmatpush.msra.mxu0 0.0
    %2006 = vmatpush.msra.mxu0 0.0
    %2007 = vmatpush.msra.mxu0 0.0
    %2008 = vmatpush.msra.mxu0 %v1961
    %2009 = vmatpush.msra.mxu0 %v1960
    %2010 = vmatmul.f32.gmra.mxu0 %v1992
    %v2011 = vpop.f32.mrf.mxu0
    %v2012 = vadd.f32 %v1988, %v2011
    %2013 = vdwg.mxu0
    %v2014 = vld [vmem:[%s4 + $0x80] sm:$0xff]
    %v2015 = vld [vmem:[%s4 + $0x88] sm:$0xff]
    %v2016 = vrot.slane %v643, 2
    %v2017 = vrot.slane %v644, 1
    %v2018 = vsel %vm799, %v2017, %v2016
    %v2019 = vsel %vm103, %v2018, 0
    %2021 = vmatpush.msra.mxu0 0.0
    %2022 = vmatpush.msra.mxu0 0.0
    %2023 = vmatpush.msra.mxu0 0.0
    %2024 = vmatpush.msra.mxu0 0.0
    %2025 = vmatpush.msra.mxu0 0.0
    %2026 = vmatpush.msra.mxu0 0.0
    %2027 = vmatpush.msra.mxu0 0.0
    %2028 = vmatpush.msra.mxu0 0.0
    %2029 = vmatpush.msra.mxu0 0.0
    %2030 = vmatpush.msra.mxu0 0.0
    %2031 = vmatpush.msra.mxu0 0.0
    %2032 = vmatpush.msra.mxu0 0.0
    %2033 = vmatpush.msra.mxu0 0.0
    %2034 = vmatpush.msra.mxu0 0.0
    %2035 = vmatpush.msra.mxu0 %v2015
    %2036 = vmatpush.msra.mxu0 %v2014
    %2037 = vmatmul.f32.gmra.mxu0 %v2019
    %v2038 = vpop.f32.mrf.mxu0
    %v2039 = vadd.f32 0.0, %v2038
    %2040 = vdwg.mxu0
    %v2041 = vadd.f32 %v2012, %v2039
    %v2042 = vld [vmem:[%s4 + $0x90] sm:$0xff]
    %v2043 = vld [vmem:[%s4 + $0x98] sm:$0xff]
    %v2044 = vrot.slane %v643, 3
    %v2045 = vrot.slane %v644, 2
    %v2046 = vsel %vm799, %v2045, %v2044
    %v2047 = vsel %vm103, %v2046, 0
    %2049 = vmatpush.msra.mxu0 0.0
    %2050 = vmatpush.msra.mxu0 0.0
    %2051 = vmatpush.msra.mxu0 0.0
    %2052 = vmatpush.msra.mxu0 0.0
    %2053 = vmatpush.msra.mxu0 0.0
    %2054 = vmatpush.msra.mxu0 0.0
    %2055 = vmatpush.msra.mxu0 0.0
    %2056 = vmatpush.msra.mxu0 0.0
    %2057 = vmatpush.msra.mxu0 0.0
    %2058 = vmatpush.msra.mxu0 0.0
    %2059 = vmatpush.msra.mxu0 0.0
    %2060 = vmatpush.msra.mxu0 0.0
    %2061 = vmatpush.msra.mxu0 0.0
    %2062 = vmatpush.msra.mxu0 0.0
    %2063 = vmatpush.msra.mxu0 %v2043
    %2064 = vmatpush.msra.mxu0 %v2042
    %2065 = vmatmul.f32.gmra.mxu0 %v2047
    %v2066 = vpop.f32.mrf.mxu0
    %v2067 = vadd.f32 0.0, %v2066
    %2068 = vdwg.mxu0
    %v2069 = vadd.f32 %v2041, %v2067
    %v2072 = vrot.slane %v1959, 7
    %v2073 = vsel %vm799, %v2072, %v1958
    %vm2075 = vcmask 58368
    %2076 = vst.msk [vmem:[#allocation2] sm:$0x3] %vm2075, %v2073
    %v2077 = vsel %vm801, %v2072, %v1958
    %2078 = vrot.lane.b32.xlu0 %v2077, 8
    %v2079 = vpop.permute.xlu0 %2078
    %vm2081 = vcmask 124993
    %2082 = vst.msk [vmem:[#allocation2 - $0x1] sm:$0x6] %vm2081, %v2079
    %v2083 = vsel %vm803, %v2072, %v1958
    %2084 = vrot.lane.b32.xlu0 %v2083, 16
    %v2085 = vpop.permute.xlu0 %2084
    %vm2087 = vcmask 191618
    %2088 = vst.msk [vmem:[#allocation2 - $0x2] sm:$0xc] %vm2087, %v2085
    %v2089 = vsel %vm805, %v2072, %v1958
    %2090 = vrot.lane.b32.xlu0 %v2089, 24
    %v2091 = vpop.permute.xlu0 %2090
    %vm2093 = vcmask 258243
    %2094 = vst.msk [vmem:[#allocation2 - $0x3] sm:$0x18] %vm2093, %v2091
    %vm2095 = vcmask 1045509
    %v2096 = vsel %vm2095, %v2072, %v1958
    %2097 = vrot.lane.b32.xlu0 %v2096, 32
    %v2098 = vpop.permute.xlu0 %2097
    %vm2100 = vcmask 324868
    %2101 = vst.msk [vmem:[#allocation2 - $0x4] sm:$0x30] %vm2100, %v2098
    %v2102 = vld [vmem:[#allocation2] sm:$0x3]
    %v2103 = vadd.f32 %v2069, %v2102
    %v2104 = vmax.f32 %v2103, 0.0
    %vm2105 = vcmask 320512
    %2106 = vst.msk [vmem:[#allocation2] sm:$0x3] %vm2105, %v2104
    %v2107 = vld [vmem:[%s4 + $0xa0] sm:$0xff]
    %v2108 = vld [vmem:[%s4 + $0xa8] sm:$0xff]
    %v2111 = vrot.slane %v196, 7
    %v2112 = vsel %vm799, %v2111, %v195
    %v2113 = vsel %vm103, %v2112, 0
    %2115 = vmatpush.msra.mxu0 0.0
    %2116 = vmatpush.msra.mxu0 0.0
    %2117 = vmatpush.msra.mxu0 0.0
    %2118 = vmatpush.msra.mxu0 0.0
    %2119 = vmatpush.msra.mxu0 0.0
    %2120 = vmatpush.msra.mxu0 0.0
    %2121 = vmatpush.msra.mxu0 0.0
    %2122 = vmatpush.msra.mxu0 0.0
    %2123 = vmatpush.msra.mxu0 0.0
    %2124 = vmatpush.msra.mxu0 0.0
    %2125 = vmatpush.msra.mxu0 0.0
    %2126 = vmatpush.msra.mxu0 0.0
    %2127 = vmatpush.msra.mxu0 0.0
    %2128 = vmatpush.msra.mxu0 0.0
    %2129 = vmatpush.msra.mxu0 %v2108
    %2130 = vmatpush.msra.mxu0 %v2107
    %2131 = vmatmul.f32.gmra.mxu0 %v2113
    %v2132 = vpop.f32.mrf.mxu0
    %v2133 = vadd.f32 0.0, %v2132
    %2134 = vdwg.mxu0
    %v2135 = vadd.f32 %v227, %v2133
    %v2136 = vld [vmem:[%s4 + $0xb0] sm:$0xff]
    %v2137 = vld [vmem:[%s4 + $0xb8] sm:$0xff]
    %v2138 = vrot.slane %v195, 1
    %v2139 = vsel %vm799, %v196, %v2138
    %v2140 = vsel %vm103, %v2139, 0
    %2142 = vmatpush.msra.mxu0 0.0
    %2143 = vmatpush.msra.mxu0 0.0
    %2144 = vmatpush.msra.mxu0 0.0
    %2145 = vmatpush.msra.mxu0 0.0
    %2146 = vmatpush.msra.mxu0 0.0
    %2147 = vmatpush.msra.mxu0 0.0
    %2148 = vmatpush.msra.mxu0 0.0
    %2149 = vmatpush.msra.mxu0 0.0
    %2150 = vmatpush.msra.mxu0 0.0
    %2151 = vmatpush.msra.mxu0 0.0
    %2152 = vmatpush.msra.mxu0 0.0
    %2153 = vmatpush.msra.mxu0 0.0
    %2154 = vmatpush.msra.mxu0 0.0
    %2155 = vmatpush.msra.mxu0 0.0
    %2156 = vmatpush.msra.mxu0 %v2137
    %2157 = vmatpush.msra.mxu0 %v2136
    %2158 = vmatmul.f32.gmra.mxu0 %v2140
    %v2159 = vpop.f32.mrf.mxu0
    %v2160 = vadd.f32 0.0, %v2159
    %2161 = vdwg.mxu0
    %v2162 = vadd.f32 %v2135, %v2160
    %v2163 = vld [vmem:[%s4 + $0xc0] sm:$0xff]
    %v2164 = vld [vmem:[%s4 + $0xc8] sm:$0xff]
    %v2165 = vrot.slane %v195, 2
    %v2166 = vrot.slane %v196, 1
    %v2167 = vsel %vm799, %v2166, %v2165
    %v2168 = vsel %vm103, %v2167, 0
    %2170 = vmatpush.msra.mxu0 0.0
    %2171 = vmatpush.msra.mxu0 0.0
    %2172 = vmatpush.msra.mxu0 0.0
    %2173 = vmatpush.msra.mxu0 0.0
    %2174 = vmatpush.msra.mxu0 0.0
    %2175 = vmatpush.msra.mxu0 0.0
    %2176 = vmatpush.msra.mxu0 0.0
    %2177 = vmatpush.msra.mxu0 0.0
    %2178 = vmatpush.msra.mxu0 0.0
    %2179 = vmatpush.msra.mxu0 0.0
    %2180 = vmatpush.msra.mxu0 0.0
    %2181 = vmatpush.msra.mxu0 0.0
    %2182 = vmatpush.msra.mxu0 0.0
    %2183 = vmatpush.msra.mxu0 0.0
    %2184 = vmatpush.msra.mxu0 %v2164
    %2185 = vmatpush.msra.mxu0 %v2163
    %2186 = vmatmul.f32.gmra.mxu0 %v2168
    %v2187 = vpop.f32.mrf.mxu0
    %v2188 = vadd.f32 0.0, %v2187
    %2189 = vdwg.mxu0
    %v2190 = vadd.f32 %v2162, %v2188
    %v2191 = vld [vmem:[%s4 + $0xd0] sm:$0xff]
    %v2192 = vld [vmem:[%s4 + $0xd8] sm:$0xff]
    %v2193 = vrot.slane %v195, 3
    %v2194 = vrot.slane %v196, 2
    %v2195 = vsel %vm799, %v2194, %v2193
    %v2196 = vsel %vm103, %v2195, 0
    %2198 = vmatpush.msra.mxu0 0.0
    %2199 = vmatpush.msra.mxu0 0.0
    %2200 = vmatpush.msra.mxu0 0.0
    %2201 = vmatpush.msra.mxu0 0.0
    %2202 = vmatpush.msra.mxu0 0.0
    %2203 = vmatpush.msra.mxu0 0.0
    %2204 = vmatpush.msra.mxu0 0.0
    %2205 = vmatpush.msra.mxu0 0.0
    %2206 = vmatpush.msra.mxu0 0.0
    %2207 = vmatpush.msra.mxu0 0.0
    %2208 = vmatpush.msra.mxu0 0.0
    %2209 = vmatpush.msra.mxu0 0.0
    %2210 = vmatpush.msra.mxu0 0.0
    %2211 = vmatpush.msra.mxu0 0.0
    %2212 = vmatpush.msra.mxu0 %v2192
    %2213 = vmatpush.msra.mxu0 %v2191
    %2214 = vmatmul.f32.gmra.mxu0 %v2196
    %v2215 = vpop.f32.mrf.mxu0
    %v2216 = vadd.f32 0.0, %v2215
    %2217 = vdwg.mxu0
    %v2218 = vadd.f32 %v2190, %v2216
    %2219 = vrot.lane.b32.xlu0 %v23, 40
    %v2220 = vpop.permute.xlu0 %2219
    %vm2222 = vcmask 451904
    %2223 = vst.msk [vmem:[#allocation2] sm:$0x3] %vm2222, %v2220
    %v2224 = vsub.f32 0.0, %v2218
    %v2225 = vmul.f32 %v2224, 1.442695
    %v2226 = vpow.pop %v2225
    %v2227 = vadd.f32 %v2226, 1.0
    %v2228 = vrcp.pop %v2227
    %2230 = vrot.lane.b32.xlu0 %v2228, 56
    %v2231 = vpop.permute.xlu0 %2230
    %vm2233 = vcmask 517568
    %2234 = vst.msk [vmem:[#allocation2] sm:$0x3] %vm2233, %v2231
    %v2235 = vld [vmem:[#allocation2] sm:$0x3]
    %v2236 = vld [vmem:[%s3] sm:$0x3]
    %v2237 = vld [vmem:[%s2] sm:$0x7]
    %v2238 = vld [vmem:[%s2 + $0x4] sm:$0x7]
    %v2240 = vrot.slane %v2235, 1
    %v2241 = vperm.slane %v2235, 0
    %v2242 = vperm.slane %v2240, 0
    %v2245 = vmul.f32 %v2237, %v2241
    %v2246 = vmul.f32 %v2238, %v2242
    %vm2247 = vcmask 518144
    %v2248 = vsel %vm2247, %v2245, 0.0
    %2249 = vadd.xlane.f32.xlu0 %v2248
    %v2250 = vpop.xlane.xlu0 %2249
    %v2251 = vsel %vm2247, %v2246, 0.0
    %2252 = vadd.xlane.f32.xlu0 %v2251
    %v2253 = vpop.xlane.xlu0 %2252
    %v2256 = vperm.slane %v2250, %v788
    %v2257 = vperm.slane %v2253, %v788
    %v2258 = vsel %vm799, %v2257, %v2256
    %v2260 = vadd.f32 %v2236, %v2258
    %vm2261 = vcmask 17408
    %2262 = vst.msk [vmem:[#allocation3] sm:$0x3] %vm2261, %v2260
    // Predicated region
    $region22: #{ccn4sr_forward.1} parent=1 // pred_check
      _
    $region23: #{ccn4sr_forward.1} parent=1 // pred_check_branch
      %2264 = sbr.rel (0) target = $region25
    $region24: #{ccn4sr_forward.1} parent=1 // pred_region
      %2266 = vsyncadd [#allocation4], 0
      %s2268 = sshll.u32 [#allocation3], 4
      %s2269 = int_to_ptr.vmem [resolvable:$true] %s2268
      %s2270 = sshll.u32 %s5, 4
      %s2271 = int_to_ptr.hbm [resolvable:$true] %s2270
      %2273 = dma.vmem_to_hbm [thread:$0]  %s2269, 32, %s2271, [#allocation4]
    $region25: #{ccn4sr_forward.1} parent=1 // pred_fallthru
      _
    // Predicated region
    $region26: #{ccn4sr_forward.1} parent=1 // pred_check
      _
    $region27: #{ccn4sr_forward.1} parent=1 // pred_check_branch
      %2275 = sbr.rel (0) target = $region29
    $region28: #{ccn4sr_forward.1} parent=1 // pred_region
      %2277 = dma.done [#allocation4], 32
    $region29: #{ccn4sr_forward.1} parent=1 // pred_fallthru
      _
    %2278 = vsyncpa [#allocation4], 1

</llo_original>
